<compile_context>
chip_gen: v7x
topology: tpu7x:2x2x1
jax: 0.10.0
libtpu: 0.0.40
codegen_flags: <defaults>
</compile_context>

<pallas_src>
import numpy as np
import jax
import jax.numpy as jnp
from jax.experimental import pallas as pl
from jax.experimental.pallas import tpu as pltpu

POSITION = [3, 5, 7]
POSITION_CANDIDATES = [(px, py) for py in POSITION for px in POSITION]
WINDOW_CANDIDATES = [1, 2]
NUM_OPS = 3           # synthetic CMMT candidate set size
T_SEQ = 10            # sequence length implied by Upsample(size=(10, 1))
D_FEAT = 32           # feature width (hidden)
B = 2                 # batch


# ---------------------------------------------------------------------------
# PyTorch bilinear upsample (align_corners=False) along the "height" axis,
# width 1 -> 1 is trivial, expressed as a (t_out, t_in) interpolation matrix.
# ---------------------------------------------------------------------------
def bilinear_matrix(t_in, t_out=T_SEQ):
    u = np.zeros((t_out, t_in), dtype=np.float32)
    scale = t_in / t_out
    for i in range(t_out):
        src = (i + 0.5) * scale - 0.5
        src = max(src, 0.0)                 # PyTorch clamps negatives to 0
        i0 = min(int(np.floor(src)), t_in - 1)
        i1 = min(i0 + 1, t_in - 1)
        lam = src - i0
        u[i, i0] += 1.0 - lam
        u[i, i1] += lam
    return jnp.asarray(u)


# Fold both window weights and both bilinear matrices into one (10, 2*m_max+1)
# matrix acting on the widest-window accumulator (narrower windows are centered
# row-subsets of the widest window, so their U is zero-padded on both sides).
def build_ueff(ww):
    m_max = max(WINDOW_CANDIDATES)
    width = 2 * m_max + 1
    ueff = jnp.zeros((T_SEQ, width), jnp.float32)
    for w_idx, m in enumerate(WINDOW_CANDIDATES):
        u = bilinear_matrix(2 * m + 1, T_SEQ)            # (10, 2m+1)
        pad = m_max - m
        ueff = ueff + ww[w_idx] * jnp.pad(u, ((0, 0), (pad, pad)))
    return ueff


# ---------------------------------------------------------------------------
# Fused kernel.
#   wo_ref   : SMEM (NUM_OPS,)            softmax op weights
#   wp_ref   : SMEM (9,)                  softmax position weights
#   cg_ref   : SMEM (1,)                  global coefficient = sum(wp)*sum(ww)
#   x_ref    : VMEM (B*T, D)              modality 1, batch folded into rows
#   y_ref    : VMEM (B*T, D)              modality 2
#   wxc_ref  : VMEM (D, 3D)               concatenated per-op x projections
#   wyc_ref  : VMEM (D, 3D)               concatenated per-op y projections
#   ueff_ref : VMEM (10, 2*m_max+1)       window-weighted bilinear matrix
#   o_ref    : VMEM (B, 10, D)            output
#   px_ref / py_ref : VMEM scratch (B*T, 3D) projected activations
# ---------------------------------------------------------------------------
def fused_cell_kernel(wo_ref, wp_ref, cg_ref, x_ref, y_ref, wxc_ref, wyc_ref,
                      ueff_ref, o_ref, px_ref, py_ref):
    Bk, _, D = o_ref.shape
    T = x_ref.shape[0] // Bk
    m = max(WINDOW_CANDIDATES)
    tw = 2 * m + 1

    # One lane-dense MXU push per modality: (B*T, D) @ (D, 3D).
    px_ref[...] = jnp.dot(x_ref[...], wxc_ref[...],
                          preferred_element_type=jnp.float32)
    py_ref[...] = jnp.dot(y_ref[...], wyc_ref[...],
                          preferred_element_type=jnp.float32)

    wo0, wo1, wo2 = wo_ref[0], wo_ref[1], wo_ref[2]
    cg = cg_ref[0]
    ueff = ueff_ref[...]                                  # (10, tw)

    def combine(a, b):
        # a, b: (rows, 3D) projected slices; elementwise op mixture (VPU/EUP).
        a0, a1, a2 = a[:, 0:D], a[:, D:2 * D], a[:, 2 * D:3 * D]
        b0, b1, b2 = b[:, 0:D], b[:, D:2 * D], b[:, 2 * D:3 * D]
        h0 = jnp.maximum(a0 + b0, 0.0)                    # additive + ReLU
        h1 = a1 * b1                                      # multiplicative
        h2 = jax.nn.sigmoid(a2) * b2                      # gated
        return wo0 * h0 + wo1 * h1 + wo2 * h2

    for b in range(Bk):                                   # B is tiny & static
        base = b * T
        # Global (full-sequence) path, added once with coefficient cg.
        zg = combine(px_ref[pl.ds(base, T), :], py_ref[pl.ds(base, T), :])

        # Widest-window accumulator: sum_p wp[p] * combine(window_p).
        # (The m=1 contribution is rows 1..3 of this; folded into ueff.)
        acc = jnp.zeros((tw, D), jnp.float32)
        for p_idx, (pxp, pyp) in enumerate(POSITION_CANDIDATES):
            xs = px_ref[pl.ds(base + pxp - m, tw), :]
            ys = py_ref[pl.ds(base + pyp - m, tw), :]
            acc = acc + wp_ref[p_idx] * combine(xs, ys)

        o_ref[b] = cg * zg + jnp.dot(ueff, acc,
                                     preferred_element_type=jnp.float32)


def forward(params, x, y):
    b_, t_, d_ = x.shape
    wp = jax.nn.softmax(params["gammas_p"], axis=-1)
    ww = jax.nn.softmax(params["gammas_w"], axis=-1)
    wo = jax.nn.softmax(params["gammas_o"], axis=-1)

    # Concatenate per-op projections -> lane-dense (D, 3D) weights.
    wx_cat = jnp.concatenate([params["Wx"][i] for i in range(NUM_OPS)], axis=1)
    wy_cat = jnp.concatenate([params["Wy"][i] for i in range(NUM_OPS)], axis=1)

    ueff = build_ueff(ww)
    cg = jnp.reshape(jnp.sum(wp) * jnp.sum(ww), (1,))     # == 1 up to fp error

    xf = x.reshape(b_ * t_, d_)
    yf = y.reshape(b_ * t_, d_)

    smem = pl.BlockSpec(memory_space=pltpu.MemorySpace.SMEM)
    vmem = pl.BlockSpec(memory_space=pltpu.MemorySpace.VMEM)
    return pl.pallas_call(
        fused_cell_kernel,
        out_shape=jax.ShapeDtypeStruct((b_, T_SEQ, d_), jnp.float32),
        in_specs=[smem, smem, smem, vmem, vmem, vmem, vmem, vmem],
        out_specs=vmem,
        scratch_shapes=[
            pltpu.VMEM((b_ * t_, NUM_OPS * d_), jnp.float32),   # projected x
            pltpu.VMEM((b_ * t_, NUM_OPS * d_), jnp.float32),   # projected y
        ],
    )(wo, wp, cg, xf, yf, wx_cat, wy_cat, ueff)


def init_params(key):
    k1, k2, k3, k4, k5 = jax.random.split(key, 5)
    return {
        "gammas_p": 0.001 * jax.random.normal(k1, (len(POSITION_CANDIDATES),), jnp.float32),
        "gammas_w": 0.001 * jax.random.normal(k2, (len(WINDOW_CANDIDATES),), jnp.float32),
        "gammas_o": 0.001 * jax.random.normal(k3, (NUM_OPS,), jnp.float32),
        "Wx": 0.02 * jax.random.normal(k4, (NUM_OPS, D_FEAT, D_FEAT), jnp.float32),
        "Wy": 0.02 * jax.random.normal(k5, (NUM_OPS, D_FEAT, D_FEAT), jnp.float32),
    }


# Pure-JAX reference (no Pallas) following the PyTorch loop structure literally.
def forward_ref(params, x, y):
    wp = jax.nn.softmax(params["gammas_p"], axis=-1)
    ww = jax.nn.softmax(params["gammas_w"], axis=-1)
    wo = jax.nn.softmax(params["gammas_o"], axis=-1)
    wx, wy = params["Wx"], params["Wy"]

    def mix(xi, yi):
        h0 = jax.nn.relu(xi @ wx[0] + yi @ wy[0])
        h1 = (xi @ wx[1]) * (yi @ wy[1])
        h2 = jax.nn.sigmoid(xi @ wx[2]) * (yi @ wy[2])
        return wo[0] * h0 + wo[1] * h1 + wo[2] * h2

    z_global = mix(x, y)
    z_out = jnp.zeros_like(z_global)
    for p_idx, (px, py) in enumerate(POSITION_CANDIDATES):
        z_out_p = jnp.zeros_like(z_global)
        for w_idx, m in enumerate(WINDOW_CANDIDATES):
            z_m = mix(x[:, px - m: px + m + 1, :], y[:, py - m: py + m + 1, :])
            u_m = bilinear_matrix(2 * m + 1, T_SEQ)
            z_m = jnp.einsum("ot,btd->bod", u_m, z_m)
            z_out_p = z_out_p + ww[w_idx] * (z_global + z_m)
        z_out = z_out + wp[p_idx] * z_out_p
    return z_out


if __name__ == "__main__":
    key = jax.random.PRNGKey(0)
    kp, kx, ky = jax.random.split(key, 3)
    params = init_params(kp)
    x = jax.random.normal(kx, (B, T_SEQ, D_FEAT), jnp.float32)
    y = jax.random.normal(ky, (B, T_SEQ, D_FEAT), jnp.float32)

    out = jax.block_until_ready(jax.jit(forward)(params, x, y))
    assert out.shape == (B, T_SEQ, D_FEAT), out.shape

    ref = jax.block_until_ready(forward_ref(params, x, y))
    np.testing.assert_allclose(np.asarray(out), np.asarray(ref), rtol=1e-5, atol=1e-5)

    print("KERNEL_OK")
</pallas_src>

<mosaic_0001>
module attributes {stable_mosaic.version = 11 : i64} {
  func.func @fused_cell_kernel(%arg0: memref<3xf32, #tpu.memory_space<smem>>, %arg1: memref<9xf32, #tpu.memory_space<smem>>, %arg2: memref<1xf32, #tpu.memory_space<smem>>, %arg3: memref<20x32xf32, #tpu.memory_space<vmem>>, %arg4: memref<20x32xf32, #tpu.memory_space<vmem>>, %arg5: memref<32x96xf32, #tpu.memory_space<vmem>>, %arg6: memref<32x96xf32, #tpu.memory_space<vmem>>, %arg7: memref<10x5xf32, #tpu.memory_space<vmem>>, %arg8: memref<2x10x32xf32, #tpu.memory_space<vmem>>, %arg9: memref<20x96xf32, #tpu.memory_space<vmem>>, %arg10: memref<20x96xf32, #tpu.memory_space<vmem>>) attributes {dimension_semantics = [], scalar_prefetch = 0 : i64, scratch_operands = 2 : i64, tpu.core_type = #tpu.core_type<tc>} {
    %c0 = arith.constant 0 : index
    %c0_0 = arith.constant 0 : index
    %0 = vector.load %arg3[%c0, %c0_0] : memref<20x32xf32, #tpu.memory_space<vmem>>, vector<20x32xf32>
    %c0_1 = arith.constant 0 : index
    %c0_2 = arith.constant 0 : index
    %1 = vector.load %arg5[%c0_1, %c0_2] : memref<32x96xf32, #tpu.memory_space<vmem>>, vector<32x96xf32>
    %cst = arith.constant dense<0.000000e+00> : vector<20x96xf32>
    %2 = tpu.matmul %0, %1, %cst {dimension_numbers = #tpu.dot_dimension_numbers<[1], [0], [0], [1], [0, 0, 1, 1], [], []>} : vector<20x32xf32>, vector<32x96xf32>, vector<20x96xf32> -> vector<20x96xf32>
    %c0_3 = arith.constant 0 : index
    %c0_4 = arith.constant 0 : index
    %3 = vector.load %arg9[%c0_3, %c0_4] : memref<20x96xf32, #tpu.memory_space<vmem>>, vector<20x96xf32>
    tpu.vector_store %arg9[%c0_3, %c0_4], %2 {strides = array<i32>} : memref<20x96xf32, #tpu.memory_space<vmem>>, vector<20x96xf32>,
    %c0_5 = arith.constant 0 : index
    %c0_6 = arith.constant 0 : index
    %4 = vector.load %arg4[%c0_5, %c0_6] : memref<20x32xf32, #tpu.memory_space<vmem>>, vector<20x32xf32>
    %c0_7 = arith.constant 0 : index
    %c0_8 = arith.constant 0 : index
    %5 = vector.load %arg6[%c0_7, %c0_8] : memref<32x96xf32, #tpu.memory_space<vmem>>, vector<32x96xf32>
    %cst_9 = arith.constant dense<0.000000e+00> : vector<20x96xf32>
    %6 = tpu.matmul %4, %5, %cst_9 {dimension_numbers = #tpu.dot_dimension_numbers<[1], [0], [0], [1], [0, 0, 1, 1], [], []>} : vector<20x32xf32>, vector<32x96xf32>, vector<20x96xf32> -> vector<20x96xf32>
    %c0_10 = arith.constant 0 : index
    %c0_11 = arith.constant 0 : index
    %7 = vector.load %arg10[%c0_10, %c0_11] : memref<20x96xf32, #tpu.memory_space<vmem>>, vector<20x96xf32>
    tpu.vector_store %arg10[%c0_10, %c0_11], %6 {strides = array<i32>} : memref<20x96xf32, #tpu.memory_space<vmem>>, vector<20x96xf32>,
    %c0_12 = arith.constant 0 : index
    %8 = memref.load %arg0[%c0_12] : memref<3xf32, #tpu.memory_space<smem>>
    %c1 = arith.constant 1 : index
    %9 = memref.load %arg0[%c1] : memref<3xf32, #tpu.memory_space<smem>>
    %c2 = arith.constant 2 : index
    %10 = memref.load %arg0[%c2] : memref<3xf32, #tpu.memory_space<smem>>
    %c0_13 = arith.constant 0 : index
    %11 = memref.load %arg2[%c0_13] : memref<1xf32, #tpu.memory_space<smem>>
    %c0_14 = arith.constant 0 : index
    %c0_15 = arith.constant 0 : index
    %12 = vector.load %arg7[%c0_14, %c0_15] : memref<10x5xf32, #tpu.memory_space<vmem>>, vector<10x5xf32>
    %c0_16 = arith.constant 0 : index
    %c0_17 = arith.constant 0 : index
    %13 = vector.load %arg9[%c0_16, %c0_17] : memref<20x96xf32, #tpu.memory_space<vmem>>, vector<10x96xf32>
    %c0_18 = arith.constant 0 : index
    %c0_19 = arith.constant 0 : index
    %14 = vector.load %arg10[%c0_18, %c0_19] : memref<20x96xf32, #tpu.memory_space<vmem>>, vector<10x96xf32>
    %15 = vector.extract_strided_slice %13 {offsets = [0, 0], sizes = [10, 32], strides = [1, 1]} : vector<10x96xf32> to vector<10x32xf32>
    %16 = vector.extract_strided_slice %13 {offsets = [0, 32], sizes = [10, 32], strides = [1, 1]} : vector<10x96xf32> to vector<10x32xf32>
    %17 = vector.extract_strided_slice %13 {offsets = [0, 64], sizes = [10, 32], strides = [1, 1]} : vector<10x96xf32> to vector<10x32xf32>
    %18 = vector.extract_strided_slice %14 {offsets = [0, 0], sizes = [10, 32], strides = [1, 1]} : vector<10x96xf32> to vector<10x32xf32>
    %19 = vector.extract_strided_slice %14 {offsets = [0, 32], sizes = [10, 32], strides = [1, 1]} : vector<10x96xf32> to vector<10x32xf32>
    %20 = vector.extract_strided_slice %14 {offsets = [0, 64], sizes = [10, 32], strides = [1, 1]} : vector<10x96xf32> to vector<10x32xf32>
    %21 = arith.addf %15, %18 : vector<10x32xf32>
    %cst_20 = arith.constant 0.000000e+00 : f32
    %22 = vector.broadcast %cst_20 : f32 to vector<10x32xf32>
    %23 = arith.maximumf %21, %22 : vector<10x32xf32>
    %24 = arith.mulf %16, %19 : vector<10x32xf32>
    %25 = arith.negf %17 : vector<10x32xf32>
    %26 = math.exp %25 : vector<10x32xf32>
    %cst_21 = arith.constant 1.000000e+00 : f32
    %27 = vector.broadcast %cst_21 : f32 to vector<10x32xf32>
    %28 = arith.addf %27, %26 : vector<10x32xf32>
    %29 = arith.divf %27, %28 : vector<10x32xf32>
    %30 = arith.mulf %29, %20 : vector<10x32xf32>
    %31 = vector.broadcast %8 : f32 to vector<10x32xf32>
    %32 = arith.mulf %31, %23 : vector<10x32xf32>
    %33 = vector.broadcast %9 : f32 to vector<10x32xf32>
    %34 = arith.mulf %33, %24 : vector<10x32xf32>
    %35 = arith.addf %32, %34 : vector<10x32xf32>
    %36 = vector.broadcast %10 : f32 to vector<10x32xf32>
    %37 = arith.mulf %36, %30 : vector<10x32xf32>
    %38 = arith.addf %35, %37 : vector<10x32xf32>
    %cst_22 = arith.constant 0.000000e+00 : f32
    %39 = vector.broadcast %cst_22 : f32 to vector<5x32xf32>
    %c1_23 = arith.constant 1 : index
    %c0_24 = arith.constant 0 : index
    %40 = vector.load %arg9[%c1_23, %c0_24] : memref<20x96xf32, #tpu.memory_space<vmem>>, vector<5x96xf32>
    %c1_25 = arith.constant 1 : index
    %c0_26 = arith.constant 0 : index
    %41 = vector.load %arg10[%c1_25, %c0_26] : memref<20x96xf32, #tpu.memory_space<vmem>>, vector<5x96xf32>
    %c0_27 = arith.constant 0 : index
    %42 = memref.load %arg1[%c0_27] : memref<9xf32, #tpu.memory_space<smem>>
    %43 = vector.extract_strided_slice %40 {offsets = [0, 0], sizes = [5, 32], strides = [1, 1]} : vector<5x96xf32> to vector<5x32xf32>
    %44 = vector.extract_strided_slice %40 {offsets = [0, 32], sizes = [5, 32], strides = [1, 1]} : vector<5x96xf32> to vector<5x32xf32>
    %45 = vector.extract_strided_slice %40 {offsets = [0, 64], sizes = [5, 32], strides = [1, 1]} : vector<5x96xf32> to vector<5x32xf32>
    %46 = vector.extract_strided_slice %41 {offsets = [0, 0], sizes = [5, 32], strides = [1, 1]} : vector<5x96xf32> to vector<5x32xf32>
    %47 = vector.extract_strided_slice %41 {offsets = [0, 32], sizes = [5, 32], strides = [1, 1]} : vector<5x96xf32> to vector<5x32xf32>
    %48 = vector.extract_strided_slice %41 {offsets = [0, 64], sizes = [5, 32], strides = [1, 1]} : vector<5x96xf32> to vector<5x32xf32>
    %49 = arith.addf %43, %46 : vector<5x32xf32>
    %cst_28 = arith.constant 0.000000e+00 : f32
    %50 = vector.broadcast %cst_28 : f32 to vector<5x32xf32>
    %51 = arith.maximumf %49, %50 : vector<5x32xf32>
    %52 = arith.mulf %44, %47 : vector<5x32xf32>
    %53 = arith.negf %45 : vector<5x32xf32>
    %54 = math.exp %53 : vector<5x32xf32>
    %cst_29 = arith.constant 1.000000e+00 : f32
    %55 = vector.broadcast %cst_29 : f32 to vector<5x32xf32>
    %56 = arith.addf %55, %54 : vector<5x32xf32>
    %57 = arith.divf %55, %56 : vector<5x32xf32>
    %58 = arith.mulf %57, %48 : vector<5x32xf32>
    %59 = vector.broadcast %8 : f32 to vector<5x32xf32>
    %60 = arith.mulf %59, %51 : vector<5x32xf32>
    %61 = vector.broadcast %9 : f32 to vector<5x32xf32>
    %62 = arith.mulf %61, %52 : vector<5x32xf32>
    %63 = arith.addf %60, %62 : vector<5x32xf32>
    %64 = vector.broadcast %10 : f32 to vector<5x32xf32>
    %65 = arith.mulf %64, %58 : vector<5x32xf32>
    %66 = arith.addf %63, %65 : vector<5x32xf32>
    %67 = vector.broadcast %42 : f32 to vector<5x32xf32>
    %68 = arith.mulf %67, %66 : vector<5x32xf32>
    %69 = arith.addf %39, %68 : vector<5x32xf32>
    %c3 = arith.constant 3 : index
    %c0_30 = arith.constant 0 : index
    %70 = vector.load %arg9[%c3, %c0_30] : memref<20x96xf32, #tpu.memory_space<vmem>>, vector<5x96xf32>
    %c1_31 = arith.constant 1 : index
    %c0_32 = arith.constant 0 : index
    %71 = vector.load %arg10[%c1_31, %c0_32] : memref<20x96xf32, #tpu.memory_space<vmem>>, vector<5x96xf32>
    %c1_33 = arith.constant 1 : index
    %72 = memref.load %arg1[%c1_33] : memref<9xf32, #tpu.memory_space<smem>>
    %73 = vector.extract_strided_slice %70 {offsets = [0, 0], sizes = [5, 32], strides = [1, 1]} : vector<5x96xf32> to vector<5x32xf32>
    %74 = vector.extract_strided_slice %70 {offsets = [0, 32], sizes = [5, 32], strides = [1, 1]} : vector<5x96xf32> to vector<5x32xf32>
    %75 = vector.extract_strided_slice %70 {offsets = [0, 64], sizes = [5, 32], strides = [1, 1]} : vector<5x96xf32> to vector<5x32xf32>
    %76 = vector.extract_strided_slice %71 {offsets = [0, 0], sizes = [5, 32], strides = [1, 1]} : vector<5x96xf32> to vector<5x32xf32>
    %77 = vector.extract_strided_slice %71 {offsets = [0, 32], sizes = [5, 32], strides = [1, 1]} : vector<5x96xf32> to vector<5x32xf32>
    %78 = vector.extract_strided_slice %71 {offsets = [0, 64], sizes = [5, 32], strides = [1, 1]} : vector<5x96xf32> to vector<5x32xf32>
    %79 = arith.addf %73, %76 : vector<5x32xf32>
    %cst_34 = arith.constant 0.000000e+00 : f32
    %80 = vector.broadcast %cst_34 : f32 to vector<5x32xf32>
    %81 = arith.maximumf %79, %80 : vector<5x32xf32>
    %82 = arith.mulf %74, %77 : vector<5x32xf32>
    %83 = arith.negf %75 : vector<5x32xf32>
    %84 = math.exp %83 : vector<5x32xf32>
    %cst_35 = arith.constant 1.000000e+00 : f32
    %85 = vector.broadcast %cst_35 : f32 to vector<5x32xf32>
    %86 = arith.addf %85, %84 : vector<5x32xf32>
    %87 = arith.divf %85, %86 : vector<5x32xf32>
    %88 = arith.mulf %87, %78 : vector<5x32xf32>
    %89 = vector.broadcast %8 : f32 to vector<5x32xf32>
    %90 = arith.mulf %89, %81 : vector<5x32xf32>
    %91 = vector.broadcast %9 : f32 to vector<5x32xf32>
    %92 = arith.mulf %91, %82 : vector<5x32xf32>
    %93 = arith.addf %90, %92 : vector<5x32xf32>
    %94 = vector.broadcast %10 : f32 to vector<5x32xf32>
    %95 = arith.mulf %94, %88 : vector<5x32xf32>
    %96 = arith.addf %93, %95 : vector<5x32xf32>
    %97 = vector.broadcast %72 : f32 to vector<5x32xf32>
    %98 = arith.mulf %97, %96 : vector<5x32xf32>
    %99 = arith.addf %69, %98 : vector<5x32xf32>
    %c5 = arith.constant 5 : index
    %c0_36 = arith.constant 0 : index
    %100 = vector.load %arg9[%c5, %c0_36] : memref<20x96xf32, #tpu.memory_space<vmem>>, vector<5x96xf32>
    %c1_37 = arith.constant 1 : index
    %c0_38 = arith.constant 0 : index
    %101 = vector.load %arg10[%c1_37, %c0_38] : memref<20x96xf32, #tpu.memory_space<vmem>>, vector<5x96xf32>
    %c2_39 = arith.constant 2 : index
    %102 = memref.load %arg1[%c2_39] : memref<9xf32, #tpu.memory_space<smem>>
    %103 = vector.extract_strided_slice %100 {offsets = [0, 0], sizes = [5, 32], strides = [1, 1]} : vector<5x96xf32> to vector<5x32xf32>
    %104 = vector.extract_strided_slice %100 {offsets = [0, 32], sizes = [5, 32], strides = [1, 1]} : vector<5x96xf32> to vector<5x32xf32>
    %105 = vector.extract_strided_slice %100 {offsets = [0, 64], sizes = [5, 32], strides = [1, 1]} : vector<5x96xf32> to vector<5x32xf32>
    %106 = vector.extract_strided_slice %101 {offsets = [0, 0], sizes = [5, 32], strides = [1, 1]} : vector<5x96xf32> to vector<5x32xf32>
    %107 = vector.extract_strided_slice %101 {offsets = [0, 32], sizes = [5, 32], strides = [1, 1]} : vector<5x96xf32> to vector<5x32xf32>
    %108 = vector.extract_strided_slice %101 {offsets = [0, 64], sizes = [5, 32], strides = [1, 1]} : vector<5x96xf32> to vector<5x32xf32>
    %109 = arith.addf %103, %106 : vector<5x32xf32>
    %cst_40 = arith.constant 0.000000e+00 : f32
    %110 = vector.broadcast %cst_40 : f32 to vector<5x32xf32>
    %111 = arith.maximumf %109, %110 : vector<5x32xf32>
    %112 = arith.mulf %104, %107 : vector<5x32xf32>
    %113 = arith.negf %105 : vector<5x32xf32>
    %114 = math.exp %113 : vector<5x32xf32>
    %cst_41 = arith.constant 1.000000e+00 : f32
    %115 = vector.broadcast %cst_41 : f32 to vector<5x32xf32>
    %116 = arith.addf %115, %114 : vector<5x32xf32>
    %117 = arith.divf %115, %116 : vector<5x32xf32>
    %118 = arith.mulf %117, %108 : vector<5x32xf32>
    %119 = vector.broadcast %8 : f32 to vector<5x32xf32>
    %120 = arith.mulf %119, %111 : vector<5x32xf32>
    %121 = vector.broadcast %9 : f32 to vector<5x32xf32>
    %122 = arith.mulf %121, %112 : vector<5x32xf32>
    %123 = arith.addf %120, %122 : vector<5x32xf32>
    %124 = vector.broadcast %10 : f32 to vector<5x32xf32>
    %125 = arith.mulf %124, %118 : vector<5x32xf32>
    %126 = arith.addf %123, %125 : vector<5x32xf32>
    %127 = vector.broadcast %102 : f32 to vector<5x32xf32>
    %128 = arith.mulf %127, %126 : vector<5x32xf32>
    %129 = arith.addf %99, %128 : vector<5x32xf32>
    %c1_42 = arith.constant 1 : index
    %c0_43 = arith.constant 0 : index
    %130 = vector.load %arg9[%c1_42, %c0_43] : memref<20x96xf32, #tpu.memory_space<vmem>>, vector<5x96xf32>
    %c3_44 = arith.constant 3 : index
    %c0_45 = arith.constant 0 : index
    %131 = vector.load %arg10[%c3_44, %c0_45] : memref<20x96xf32, #tpu.memory_space<vmem>>, vector<5x96xf32>
    %c3_46 = arith.constant 3 : index
    %132 = memref.load %arg1[%c3_46] : memref<9xf32, #tpu.memory_space<smem>>
    %133 = vector.extract_strided_slice %130 {offsets = [0, 0], sizes = [5, 32], strides = [1, 1]} : vector<5x96xf32> to vector<5x32xf32>
    %134 = vector.extract_strided_slice %130 {offsets = [0, 32], sizes = [5, 32], strides = [1, 1]} : vector<5x96xf32> to vector<5x32xf32>
    %135 = vector.extract_strided_slice %130 {offsets = [0, 64], sizes = [5, 32], strides = [1, 1]} : vector<5x96xf32> to vector<5x32xf32>
    %136 = vector.extract_strided_slice %131 {offsets = [0, 0], sizes = [5, 32], strides = [1, 1]} : vector<5x96xf32> to vector<5x32xf32>
    %137 = vector.extract_strided_slice %131 {offsets = [0, 32], sizes = [5, 32], strides = [1, 1]} : vector<5x96xf32> to vector<5x32xf32>
    %138 = vector.extract_strided_slice %131 {offsets = [0, 64], sizes = [5, 32], strides = [1, 1]} : vector<5x96xf32> to vector<5x32xf32>
    %139 = arith.addf %133, %136 : vector<5x32xf32>
    %cst_47 = arith.constant 0.000000e+00 : f32
    %140 = vector.broadcast %cst_47 : f32 to vector<5x32xf32>
    %141 = arith.maximumf %139, %140 : vector<5x32xf32>
    %142 = arith.mulf %134, %137 : vector<5x32xf32>
    %143 = arith.negf %135 : vector<5x32xf32>
    %144 = math.exp %143 : vector<5x32xf32>
    %cst_48 = arith.constant 1.000000e+00 : f32
    %145 = vector.broadcast %cst_48 : f32 to vector<5x32xf32>
    %146 = arith.addf %145, %144 : vector<5x32xf32>
    %147 = arith.divf %145, %146 : vector<5x32xf32>
    %148 = arith.mulf %147, %138 : vector<5x32xf32>
    %149 = vector.broadcast %8 : f32 to vector<5x32xf32>
    %150 = arith.mulf %149, %141 : vector<5x32xf32>
    %151 = vector.broadcast %9 : f32 to vector<5x32xf32>
    %152 = arith.mulf %151, %142 : vector<5x32xf32>
    %153 = arith.addf %150, %152 : vector<5x32xf32>
    %154 = vector.broadcast %10 : f32 to vector<5x32xf32>
    %155 = arith.mulf %154, %148 : vector<5x32xf32>
    %156 = arith.addf %153, %155 : vector<5x32xf32>
    %157 = vector.broadcast %132 : f32 to vector<5x32xf32>
    %158 = arith.mulf %157, %156 : vector<5x32xf32>
    %159 = arith.addf %129, %158 : vector<5x32xf32>
    %c3_49 = arith.constant 3 : index
    %c0_50 = arith.constant 0 : index
    %160 = vector.load %arg9[%c3_49, %c0_50] : memref<20x96xf32, #tpu.memory_space<vmem>>, vector<5x96xf32>
    %c3_51 = arith.constant 3 : index
    %c0_52 = arith.constant 0 : index
    %161 = vector.load %arg10[%c3_51, %c0_52] : memref<20x96xf32, #tpu.memory_space<vmem>>, vector<5x96xf32>
    %c4 = arith.constant 4 : index
    %162 = memref.load %arg1[%c4] : memref<9xf32, #tpu.memory_space<smem>>
    %163 = vector.extract_strided_slice %160 {offsets = [0, 0], sizes = [5, 32], strides = [1, 1]} : vector<5x96xf32> to vector<5x32xf32>
    %164 = vector.extract_strided_slice %160 {offsets = [0, 32], sizes = [5, 32], strides = [1, 1]} : vector<5x96xf32> to vector<5x32xf32>
    %165 = vector.extract_strided_slice %160 {offsets = [0, 64], sizes = [5, 32], strides = [1, 1]} : vector<5x96xf32> to vector<5x32xf32>
    %166 = vector.extract_strided_slice %161 {offsets = [0, 0], sizes = [5, 32], strides = [1, 1]} : vector<5x96xf32> to vector<5x32xf32>
    %167 = vector.extract_strided_slice %161 {offsets = [0, 32], sizes = [5, 32], strides = [1, 1]} : vector<5x96xf32> to vector<5x32xf32>
    %168 = vector.extract_strided_slice %161 {offsets = [0, 64], sizes = [5, 32], strides = [1, 1]} : vector<5x96xf32> to vector<5x32xf32>
    %169 = arith.addf %163, %166 : vector<5x32xf32>
    %cst_53 = arith.constant 0.000000e+00 : f32
    %170 = vector.broadcast %cst_53 : f32 to vector<5x32xf32>
    %171 = arith.maximumf %169, %170 : vector<5x32xf32>
    %172 = arith.mulf %164, %167 : vector<5x32xf32>
    %173 = arith.negf %165 : vector<5x32xf32>
    %174 = math.exp %173 : vector<5x32xf32>
    %cst_54 = arith.constant 1.000000e+00 : f32
    %175 = vector.broadcast %cst_54 : f32 to vector<5x32xf32>
    %176 = arith.addf %175, %174 : vector<5x32xf32>
    %177 = arith.divf %175, %176 : vector<5x32xf32>
    %178 = arith.mulf %177, %168 : vector<5x32xf32>
    %179 = vector.broadcast %8 : f32 to vector<5x32xf32>
    %180 = arith.mulf %179, %171 : vector<5x32xf32>
    %181 = vector.broadcast %9 : f32 to vector<5x32xf32>
    %182 = arith.mulf %181, %172 : vector<5x32xf32>
    %183 = arith.addf %180, %182 : vector<5x32xf32>
    %184 = vector.broadcast %10 : f32 to vector<5x32xf32>
    %185 = arith.mulf %184, %178 : vector<5x32xf32>
    %186 = arith.addf %183, %185 : vector<5x32xf32>
    %187 = vector.broadcast %162 : f32 to vector<5x32xf32>
    %188 = arith.mulf %187, %186 : vector<5x32xf32>
    %189 = arith.addf %159, %188 : vector<5x32xf32>
    %c5_55 = arith.constant 5 : index
    %c0_56 = arith.constant 0 : index
    %190 = vector.load %arg9[%c5_55, %c0_56] : memref<20x96xf32, #tpu.memory_space<vmem>>, vector<5x96xf32>
    %c3_57 = arith.constant 3 : index
    %c0_58 = arith.constant 0 : index
    %191 = vector.load %arg10[%c3_57, %c0_58] : memref<20x96xf32, #tpu.memory_space<vmem>>, vector<5x96xf32>
    %c5_59 = arith.constant 5 : index
    %192 = memref.load %arg1[%c5_59] : memref<9xf32, #tpu.memory_space<smem>>
    %193 = vector.extract_strided_slice %190 {offsets = [0, 0], sizes = [5, 32], strides = [1, 1]} : vector<5x96xf32> to vector<5x32xf32>
    %194 = vector.extract_strided_slice %190 {offsets = [0, 32], sizes = [5, 32], strides = [1, 1]} : vector<5x96xf32> to vector<5x32xf32>
    %195 = vector.extract_strided_slice %190 {offsets = [0, 64], sizes = [5, 32], strides = [1, 1]} : vector<5x96xf32> to vector<5x32xf32>
    %196 = vector.extract_strided_slice %191 {offsets = [0, 0], sizes = [5, 32], strides = [1, 1]} : vector<5x96xf32> to vector<5x32xf32>
    %197 = vector.extract_strided_slice %191 {offsets = [0, 32], sizes = [5, 32], strides = [1, 1]} : vector<5x96xf32> to vector<5x32xf32>
    %198 = vector.extract_strided_slice %191 {offsets = [0, 64], sizes = [5, 32], strides = [1, 1]} : vector<5x96xf32> to vector<5x32xf32>
    %199 = arith.addf %193, %196 : vector<5x32xf32>
    %cst_60 = arith.constant 0.000000e+00 : f32
    %200 = vector.broadcast %cst_60 : f32 to vector<5x32xf32>
    %201 = arith.maximumf %199, %200 : vector<5x32xf32>
    %202 = arith.mulf %194, %197 : vector<5x32xf32>
    %203 = arith.negf %195 : vector<5x32xf32>
    %204 = math.exp %203 : vector<5x32xf32>
    %cst_61 = arith.constant 1.000000e+00 : f32
    %205 = vector.broadcast %cst_61 : f32 to vector<5x32xf32>
    %206 = arith.addf %205, %204 : vector<5x32xf32>
    %207 = arith.divf %205, %206 : vector<5x32xf32>
    %208 = arith.mulf %207, %198 : vector<5x32xf32>
    %209 = vector.broadcast %8 : f32 to vector<5x32xf32>
    %210 = arith.mulf %209, %201 : vector<5x32xf32>
    %211 = vector.broadcast %9 : f32 to vector<5x32xf32>
    %212 = arith.mulf %211, %202 : vector<5x32xf32>
    %213 = arith.addf %210, %212 : vector<5x32xf32>
    %214 = vector.broadcast %10 : f32 to vector<5x32xf32>
    %215 = arith.mulf %214, %208 : vector<5x32xf32>
    %216 = arith.addf %213, %215 : vector<5x32xf32>
    %217 = vector.broadcast %192 : f32 to vector<5x32xf32>
    %218 = arith.mulf %217, %216 : vector<5x32xf32>
    %219 = arith.addf %189, %218 : vector<5x32xf32>
    %c1_62 = arith.constant 1 : index
    %c0_63 = arith.constant 0 : index
    %220 = vector.load %arg9[%c1_62, %c0_63] : memref<20x96xf32, #tpu.memory_space<vmem>>, vector<5x96xf32>
    %c5_64 = arith.constant 5 : index
    %c0_65 = arith.constant 0 : index
    %221 = vector.load %arg10[%c5_64, %c0_65] : memref<20x96xf32, #tpu.memory_space<vmem>>, vector<5x96xf32>
    %c6 = arith.constant 6 : index
    %222 = memref.load %arg1[%c6] : memref<9xf32, #tpu.memory_space<smem>>
    %223 = vector.extract_strided_slice %220 {offsets = [0, 0], sizes = [5, 32], strides = [1, 1]} : vector<5x96xf32> to vector<5x32xf32>
    %224 = vector.extract_strided_slice %220 {offsets = [0, 32], sizes = [5, 32], strides = [1, 1]} : vector<5x96xf32> to vector<5x32xf32>
    %225 = vector.extract_strided_slice %220 {offsets = [0, 64], sizes = [5, 32], strides = [1, 1]} : vector<5x96xf32> to vector<5x32xf32>
    %226 = vector.extract_strided_slice %221 {offsets = [0, 0], sizes = [5, 32], strides = [1, 1]} : vector<5x96xf32> to vector<5x32xf32>
    %227 = vector.extract_strided_slice %221 {offsets = [0, 32], sizes = [5, 32], strides = [1, 1]} : vector<5x96xf32> to vector<5x32xf32>
    %228 = vector.extract_strided_slice %221 {offsets = [0, 64], sizes = [5, 32], strides = [1, 1]} : vector<5x96xf32> to vector<5x32xf32>
    %229 = arith.addf %223, %226 : vector<5x32xf32>
    %cst_66 = arith.constant 0.000000e+00 : f32
    %230 = vector.broadcast %cst_66 : f32 to vector<5x32xf32>
    %231 = arith.maximumf %229, %230 : vector<5x32xf32>
    %232 = arith.mulf %224, %227 : vector<5x32xf32>
    %233 = arith.negf %225 : vector<5x32xf32>
    %234 = math.exp %233 : vector<5x32xf32>
    %cst_67 = arith.constant 1.000000e+00 : f32
    %235 = vector.broadcast %cst_67 : f32 to vector<5x32xf32>
    %236 = arith.addf %235, %234 : vector<5x32xf32>
    %237 = arith.divf %235, %236 : vector<5x32xf32>
    %238 = arith.mulf %237, %228 : vector<5x32xf32>
    %239 = vector.broadcast %8 : f32 to vector<5x32xf32>
    %240 = arith.mulf %239, %231 : vector<5x32xf32>
    %241 = vector.broadcast %9 : f32 to vector<5x32xf32>
    %242 = arith.mulf %241, %232 : vector<5x32xf32>
    %243 = arith.addf %240, %242 : vector<5x32xf32>
    %244 = vector.broadcast %10 : f32 to vector<5x32xf32>
    %245 = arith.mulf %244, %238 : vector<5x32xf32>
    %246 = arith.addf %243, %245 : vector<5x32xf32>
    %247 = vector.broadcast %222 : f32 to vector<5x32xf32>
    %248 = arith.mulf %247, %246 : vector<5x32xf32>
    %249 = arith.addf %219, %248 : vector<5x32xf32>
    %c3_68 = arith.constant 3 : index
    %c0_69 = arith.constant 0 : index
    %250 = vector.load %arg9[%c3_68, %c0_69] : memref<20x96xf32, #tpu.memory_space<vmem>>, vector<5x96xf32>
    %c5_70 = arith.constant 5 : index
    %c0_71 = arith.constant 0 : index
    %251 = vector.load %arg10[%c5_70, %c0_71] : memref<20x96xf32, #tpu.memory_space<vmem>>, vector<5x96xf32>
    %c7 = arith.constant 7 : index
    %252 = memref.load %arg1[%c7] : memref<9xf32, #tpu.memory_space<smem>>
    %253 = vector.extract_strided_slice %250 {offsets = [0, 0], sizes = [5, 32], strides = [1, 1]} : vector<5x96xf32> to vector<5x32xf32>
    %254 = vector.extract_strided_slice %250 {offsets = [0, 32], sizes = [5, 32], strides = [1, 1]} : vector<5x96xf32> to vector<5x32xf32>
    %255 = vector.extract_strided_slice %250 {offsets = [0, 64], sizes = [5, 32], strides = [1, 1]} : vector<5x96xf32> to vector<5x32xf32>
    %256 = vector.extract_strided_slice %251 {offsets = [0, 0], sizes = [5, 32], strides = [1, 1]} : vector<5x96xf32> to vector<5x32xf32>
    %257 = vector.extract_strided_slice %251 {offsets = [0, 32], sizes = [5, 32], strides = [1, 1]} : vector<5x96xf32> to vector<5x32xf32>
    %258 = vector.extract_strided_slice %251 {offsets = [0, 64], sizes = [5, 32], strides = [1, 1]} : vector<5x96xf32> to vector<5x32xf32>
    %259 = arith.addf %253, %256 : vector<5x32xf32>
    %cst_72 = arith.constant 0.000000e+00 : f32
    %260 = vector.broadcast %cst_72 : f32 to vector<5x32xf32>
    %261 = arith.maximumf %259, %260 : vector<5x32xf32>
    %262 = arith.mulf %254, %257 : vector<5x32xf32>
    %263 = arith.negf %255 : vector<5x32xf32>
    %264 = math.exp %263 : vector<5x32xf32>
    %cst_73 = arith.constant 1.000000e+00 : f32
    %265 = vector.broadcast %cst_73 : f32 to vector<5x32xf32>
    %266 = arith.addf %265, %264 : vector<5x32xf32>
    %267 = arith.divf %265, %266 : vector<5x32xf32>
    %268 = arith.mulf %267, %258 : vector<5x32xf32>
    %269 = vector.broadcast %8 : f32 to vector<5x32xf32>
    %270 = arith.mulf %269, %261 : vector<5x32xf32>
    %271 = vector.broadcast %9 : f32 to vector<5x32xf32>
    %272 = arith.mulf %271, %262 : vector<5x32xf32>
    %273 = arith.addf %270, %272 : vector<5x32xf32>
    %274 = vector.broadcast %10 : f32 to vector<5x32xf32>
    %275 = arith.mulf %274, %268 : vector<5x32xf32>
    %276 = arith.addf %273, %275 : vector<5x32xf32>
    %277 = vector.broadcast %252 : f32 to vector<5x32xf32>
    %278 = arith.mulf %277, %276 : vector<5x32xf32>
    %279 = arith.addf %249, %278 : vector<5x32xf32>
    %c5_74 = arith.constant 5 : index
    %c0_75 = arith.constant 0 : index
    %280 = vector.load %arg9[%c5_74, %c0_75] : memref<20x96xf32, #tpu.memory_space<vmem>>, vector<5x96xf32>
    %c5_76 = arith.constant 5 : index
    %c0_77 = arith.constant 0 : index
    %281 = vector.load %arg10[%c5_76, %c0_77] : memref<20x96xf32, #tpu.memory_space<vmem>>, vector<5x96xf32>
    %c8 = arith.constant 8 : index
    %282 = memref.load %arg1[%c8] : memref<9xf32, #tpu.memory_space<smem>>
    %283 = vector.extract_strided_slice %280 {offsets = [0, 0], sizes = [5, 32], strides = [1, 1]} : vector<5x96xf32> to vector<5x32xf32>
    %284 = vector.extract_strided_slice %280 {offsets = [0, 32], sizes = [5, 32], strides = [1, 1]} : vector<5x96xf32> to vector<5x32xf32>
    %285 = vector.extract_strided_slice %280 {offsets = [0, 64], sizes = [5, 32], strides = [1, 1]} : vector<5x96xf32> to vector<5x32xf32>
    %286 = vector.extract_strided_slice %281 {offsets = [0, 0], sizes = [5, 32], strides = [1, 1]} : vector<5x96xf32> to vector<5x32xf32>
    %287 = vector.extract_strided_slice %281 {offsets = [0, 32], sizes = [5, 32], strides = [1, 1]} : vector<5x96xf32> to vector<5x32xf32>
    %288 = vector.extract_strided_slice %281 {offsets = [0, 64], sizes = [5, 32], strides = [1, 1]} : vector<5x96xf32> to vector<5x32xf32>
    %289 = arith.addf %283, %286 : vector<5x32xf32>
    %cst_78 = arith.constant 0.000000e+00 : f32
    %290 = vector.broadcast %cst_78 : f32 to vector<5x32xf32>
    %291 = arith.maximumf %289, %290 : vector<5x32xf32>
    %292 = arith.mulf %284, %287 : vector<5x32xf32>
    %293 = arith.negf %285 : vector<5x32xf32>
    %294 = math.exp %293 : vector<5x32xf32>
    %cst_79 = arith.constant 1.000000e+00 : f32
    %295 = vector.broadcast %cst_79 : f32 to vector<5x32xf32>
    %296 = arith.addf %295, %294 : vector<5x32xf32>
    %297 = arith.divf %295, %296 : vector<5x32xf32>
    %298 = arith.mulf %297, %288 : vector<5x32xf32>
    %299 = vector.broadcast %8 : f32 to vector<5x32xf32>
    %300 = arith.mulf %299, %291 : vector<5x32xf32>
    %301 = vector.broadcast %9 : f32 to vector<5x32xf32>
    %302 = arith.mulf %301, %292 : vector<5x32xf32>
    %303 = arith.addf %300, %302 : vector<5x32xf32>
    %304 = vector.broadcast %10 : f32 to vector<5x32xf32>
    %305 = arith.mulf %304, %298 : vector<5x32xf32>
    %306 = arith.addf %303, %305 : vector<5x32xf32>
    %307 = vector.broadcast %282 : f32 to vector<5x32xf32>
    %308 = arith.mulf %307, %306 : vector<5x32xf32>
    %309 = arith.addf %279, %308 : vector<5x32xf32>
    %310 = vector.broadcast %11 : f32 to vector<10x32xf32>
    %311 = arith.mulf %310, %38 : vector<10x32xf32>
    %cst_80 = arith.constant dense<0.000000e+00> : vector<10x32xf32>
    %312 = tpu.matmul %12, %309, %cst_80 {dimension_numbers = #tpu.dot_dimension_numbers<[1], [0], [0], [1], [0, 0, 1, 1], [], []>} : vector<10x5xf32>, vector<5x32xf32>, vector<10x32xf32> -> vector<10x32xf32>
    %313 = arith.addf %311, %312 : vector<10x32xf32>
    %c0_81 = arith.constant 0 : index
    %c0_82 = arith.constant 0 : index
    %c0_83 = arith.constant 0 : index
    %314 = vector.load %arg8[%c0_81, %c0_82, %c0_83] : memref<2x10x32xf32, #tpu.memory_space<vmem>>, vector<1x10x32xf32>
    %315 = vector.shape_cast %314 : vector<1x10x32xf32> to vector<10x32xf32>
    %316 = vector.shape_cast %313 : vector<10x32xf32> to vector<1x10x32xf32>
    tpu.vector_store %arg8[%c0_81, %c0_82, %c0_83], %316 {strides = array<i32>} : memref<2x10x32xf32, #tpu.memory_space<vmem>>, vector<1x10x32xf32>,
    %c10 = arith.constant 10 : index
    %c0_84 = arith.constant 0 : index
    %317 = vector.load %arg9[%c10, %c0_84] : memref<20x96xf32, #tpu.memory_space<vmem>>, vector<10x96xf32>
    %c10_85 = arith.constant 10 : index
    %c0_86 = arith.constant 0 : index
    %318 = vector.load %arg10[%c10_85, %c0_86] : memref<20x96xf32, #tpu.memory_space<vmem>>, vector<10x96xf32>
    %319 = vector.extract_strided_slice %317 {offsets = [0, 0], sizes = [10, 32], strides = [1, 1]} : vector<10x96xf32> to vector<10x32xf32>
    %320 = vector.extract_strided_slice %317 {offsets = [0, 32], sizes = [10, 32], strides = [1, 1]} : vector<10x96xf32> to vector<10x32xf32>
    %321 = vector.extract_strided_slice %317 {offsets = [0, 64], sizes = [10, 32], strides = [1, 1]} : vector<10x96xf32> to vector<10x32xf32>
    %322 = vector.extract_strided_slice %318 {offsets = [0, 0], sizes = [10, 32], strides = [1, 1]} : vector<10x96xf32> to vector<10x32xf32>
    %323 = vector.extract_strided_slice %318 {offsets = [0, 32], sizes = [10, 32], strides = [1, 1]} : vector<10x96xf32> to vector<10x32xf32>
    %324 = vector.extract_strided_slice %318 {offsets = [0, 64], sizes = [10, 32], strides = [1, 1]} : vector<10x96xf32> to vector<10x32xf32>
    %325 = arith.addf %319, %322 : vector<10x32xf32>
    %cst_87 = arith.constant 0.000000e+00 : f32
    %326 = vector.broadcast %cst_87 : f32 to vector<10x32xf32>
    %327 = arith.maximumf %325, %326 : vector<10x32xf32>
    %328 = arith.mulf %320, %323 : vector<10x32xf32>
    %329 = arith.negf %321 : vector<10x32xf32>
    %330 = math.exp %329 : vector<10x32xf32>
    %cst_88 = arith.constant 1.000000e+00 : f32
    %331 = vector.broadcast %cst_88 : f32 to vector<10x32xf32>
    %332 = arith.addf %331, %330 : vector<10x32xf32>
    %333 = arith.divf %331, %332 : vector<10x32xf32>
    %334 = arith.mulf %333, %324 : vector<10x32xf32>
    %335 = vector.broadcast %8 : f32 to vector<10x32xf32>
    %336 = arith.mulf %335, %327 : vector<10x32xf32>
    %337 = vector.broadcast %9 : f32 to vector<10x32xf32>
    %338 = arith.mulf %337, %328 : vector<10x32xf32>
    %339 = arith.addf %336, %338 : vector<10x32xf32>
    %340 = vector.broadcast %10 : f32 to vector<10x32xf32>
    %341 = arith.mulf %340, %334 : vector<10x32xf32>
    %342 = arith.addf %339, %341 : vector<10x32xf32>
    %cst_89 = arith.constant 0.000000e+00 : f32
    %343 = vector.broadcast %cst_89 : f32 to vector<5x32xf32>
    %c11 = arith.constant 11 : index
    %c0_90 = arith.constant 0 : index
    %344 = vector.load %arg9[%c11, %c0_90] : memref<20x96xf32, #tpu.memory_space<vmem>>, vector<5x96xf32>
    %c11_91 = arith.constant 11 : index
    %c0_92 = arith.constant 0 : index
    %345 = vector.load %arg10[%c11_91, %c0_92] : memref<20x96xf32, #tpu.memory_space<vmem>>, vector<5x96xf32>
    %c0_93 = arith.constant 0 : index
    %346 = memref.load %arg1[%c0_93] : memref<9xf32, #tpu.memory_space<smem>>
    %347 = vector.extract_strided_slice %344 {offsets = [0, 0], sizes = [5, 32], strides = [1, 1]} : vector<5x96xf32> to vector<5x32xf32>
    %348 = vector.extract_strided_slice %344 {offsets = [0, 32], sizes = [5, 32], strides = [1, 1]} : vector<5x96xf32> to vector<5x32xf32>
    %349 = vector.extract_strided_slice %344 {offsets = [0, 64], sizes = [5, 32], strides = [1, 1]} : vector<5x96xf32> to vector<5x32xf32>
    %350 = vector.extract_strided_slice %345 {offsets = [0, 0], sizes = [5, 32], strides = [1, 1]} : vector<5x96xf32> to vector<5x32xf32>
    %351 = vector.extract_strided_slice %345 {offsets = [0, 32], sizes = [5, 32], strides = [1, 1]} : vector<5x96xf32> to vector<5x32xf32>
    %352 = vector.extract_strided_slice %345 {offsets = [0, 64], sizes = [5, 32], strides = [1, 1]} : vector<5x96xf32> to vector<5x32xf32>
    %353 = arith.addf %347, %350 : vector<5x32xf32>
    %cst_94 = arith.constant 0.000000e+00 : f32
    %354 = vector.broadcast %cst_94 : f32 to vector<5x32xf32>
    %355 = arith.maximumf %353, %354 : vector<5x32xf32>
    %356 = arith.mulf %348, %351 : vector<5x32xf32>
    %357 = arith.negf %349 : vector<5x32xf32>
    %358 = math.exp %357 : vector<5x32xf32>
    %cst_95 = arith.constant 1.000000e+00 : f32
    %359 = vector.broadcast %cst_95 : f32 to vector<5x32xf32>
    %360 = arith.addf %359, %358 : vector<5x32xf32>
    %361 = arith.divf %359, %360 : vector<5x32xf32>
    %362 = arith.mulf %361, %352 : vector<5x32xf32>
    %363 = vector.broadcast %8 : f32 to vector<5x32xf32>
    %364 = arith.mulf %363, %355 : vector<5x32xf32>
    %365 = vector.broadcast %9 : f32 to vector<5x32xf32>
    %366 = arith.mulf %365, %356 : vector<5x32xf32>
    %367 = arith.addf %364, %366 : vector<5x32xf32>
    %368 = vector.broadcast %10 : f32 to vector<5x32xf32>
    %369 = arith.mulf %368, %362 : vector<5x32xf32>
    %370 = arith.addf %367, %369 : vector<5x32xf32>
    %371 = vector.broadcast %346 : f32 to vector<5x32xf32>
    %372 = arith.mulf %371, %370 : vector<5x32xf32>
    %373 = arith.addf %343, %372 : vector<5x32xf32>
    %c13 = arith.constant 13 : index
    %c0_96 = arith.constant 0 : index
    %374 = vector.load %arg9[%c13, %c0_96] : memref<20x96xf32, #tpu.memory_space<vmem>>, vector<5x96xf32>
    %c11_97 = arith.constant 11 : index
    %c0_98 = arith.constant 0 : index
    %375 = vector.load %arg10[%c11_97, %c0_98] : memref<20x96xf32, #tpu.memory_space<vmem>>, vector<5x96xf32>
    %c1_99 = arith.constant 1 : index
    %376 = memref.load %arg1[%c1_99] : memref<9xf32, #tpu.memory_space<smem>>
    %377 = vector.extract_strided_slice %374 {offsets = [0, 0], sizes = [5, 32], strides = [1, 1]} : vector<5x96xf32> to vector<5x32xf32>
    %378 = vector.extract_strided_slice %374 {offsets = [0, 32], sizes = [5, 32], strides = [1, 1]} : vector<5x96xf32> to vector<5x32xf32>
    %379 = vector.extract_strided_slice %374 {offsets = [0, 64], sizes = [5, 32], strides = [1, 1]} : vector<5x96xf32> to vector<5x32xf32>
    %380 = vector.extract_strided_slice %375 {offsets = [0, 0], sizes = [5, 32], strides = [1, 1]} : vector<5x96xf32> to vector<5x32xf32>
    %381 = vector.extract_strided_slice %375 {offsets = [0, 32], sizes = [5, 32], strides = [1, 1]} : vector<5x96xf32> to vector<5x32xf32>
    %382 = vector.extract_strided_slice %375 {offsets = [0, 64], sizes = [5, 32], strides = [1, 1]} : vector<5x96xf32> to vector<5x32xf32>
    %383 = arith.addf %377, %380 : vector<5x32xf32>
    %cst_100 = arith.constant 0.000000e+00 : f32
    %384 = vector.broadcast %cst_100 : f32 to vector<5x32xf32>
    %385 = arith.maximumf %383, %384 : vector<5x32xf32>
    %386 = arith.mulf %378, %381 : vector<5x32xf32>
    %387 = arith.negf %379 : vector<5x32xf32>
    %388 = math.exp %387 : vector<5x32xf32>
    %cst_101 = arith.constant 1.000000e+00 : f32
    %389 = vector.broadcast %cst_101 : f32 to vector<5x32xf32>
    %390 = arith.addf %389, %388 : vector<5x32xf32>
    %391 = arith.divf %389, %390 : vector<5x32xf32>
    %392 = arith.mulf %391, %382 : vector<5x32xf32>
    %393 = vector.broadcast %8 : f32 to vector<5x32xf32>
    %394 = arith.mulf %393, %385 : vector<5x32xf32>
    %395 = vector.broadcast %9 : f32 to vector<5x32xf32>
    %396 = arith.mulf %395, %386 : vector<5x32xf32>
    %397 = arith.addf %394, %396 : vector<5x32xf32>
    %398 = vector.broadcast %10 : f32 to vector<5x32xf32>
    %399 = arith.mulf %398, %392 : vector<5x32xf32>
    %400 = arith.addf %397, %399 : vector<5x32xf32>
    %401 = vector.broadcast %376 : f32 to vector<5x32xf32>
    %402 = arith.mulf %401, %400 : vector<5x32xf32>
    %403 = arith.addf %373, %402 : vector<5x32xf32>
    %c15 = arith.constant 15 : index
    %c0_102 = arith.constant 0 : index
    %404 = vector.load %arg9[%c15, %c0_102] : memref<20x96xf32, #tpu.memory_space<vmem>>, vector<5x96xf32>
    %c11_103 = arith.constant 11 : index
    %c0_104 = arith.constant 0 : index
    %405 = vector.load %arg10[%c11_103, %c0_104] : memref<20x96xf32, #tpu.memory_space<vmem>>, vector<5x96xf32>
    %c2_105 = arith.constant 2 : index
    %406 = memref.load %arg1[%c2_105] : memref<9xf32, #tpu.memory_space<smem>>
    %407 = vector.extract_strided_slice %404 {offsets = [0, 0], sizes = [5, 32], strides = [1, 1]} : vector<5x96xf32> to vector<5x32xf32>
    %408 = vector.extract_strided_slice %404 {offsets = [0, 32], sizes = [5, 32], strides = [1, 1]} : vector<5x96xf32> to vector<5x32xf32>
    %409 = vector.extract_strided_slice %404 {offsets = [0, 64], sizes = [5, 32], strides = [1, 1]} : vector<5x96xf32> to vector<5x32xf32>
    %410 = vector.extract_strided_slice %405 {offsets = [0, 0], sizes = [5, 32], strides = [1, 1]} : vector<5x96xf32> to vector<5x32xf32>
    %411 = vector.extract_strided_slice %405 {offsets = [0, 32], sizes = [5, 32], strides = [1, 1]} : vector<5x96xf32> to vector<5x32xf32>
    %412 = vector.extract_strided_slice %405 {offsets = [0, 64], sizes = [5, 32], strides = [1, 1]} : vector<5x96xf32> to vector<5x32xf32>
    %413 = arith.addf %407, %410 : vector<5x32xf32>
    %cst_106 = arith.constant 0.000000e+00 : f32
    %414 = vector.broadcast %cst_106 : f32 to vector<5x32xf32>
    %415 = arith.maximumf %413, %414 : vector<5x32xf32>
    %416 = arith.mulf %408, %411 : vector<5x32xf32>
    %417 = arith.negf %409 : vector<5x32xf32>
    %418 = math.exp %417 : vector<5x32xf32>
    %cst_107 = arith.constant 1.000000e+00 : f32
    %419 = vector.broadcast %cst_107 : f32 to vector<5x32xf32>
    %420 = arith.addf %419, %418 : vector<5x32xf32>
    %421 = arith.divf %419, %420 : vector<5x32xf32>
    %422 = arith.mulf %421, %412 : vector<5x32xf32>
    %423 = vector.broadcast %8 : f32 to vector<5x32xf32>
    %424 = arith.mulf %423, %415 : vector<5x32xf32>
    %425 = vector.broadcast %9 : f32 to vector<5x32xf32>
    %426 = arith.mulf %425, %416 : vector<5x32xf32>
    %427 = arith.addf %424, %426 : vector<5x32xf32>
    %428 = vector.broadcast %10 : f32 to vector<5x32xf32>
    %429 = arith.mulf %428, %422 : vector<5x32xf32>
    %430 = arith.addf %427, %429 : vector<5x32xf32>
    %431 = vector.broadcast %406 : f32 to vector<5x32xf32>
    %432 = arith.mulf %431, %430 : vector<5x32xf32>
    %433 = arith.addf %403, %432 : vector<5x32xf32>
    %c11_108 = arith.constant 11 : index
    %c0_109 = arith.constant 0 : index
    %434 = vector.load %arg9[%c11_108, %c0_109] : memref<20x96xf32, #tpu.memory_space<vmem>>, vector<5x96xf32>
    %c13_110 = arith.constant 13 : index
    %c0_111 = arith.constant 0 : index
    %435 = vector.load %arg10[%c13_110, %c0_111] : memref<20x96xf32, #tpu.memory_space<vmem>>, vector<5x96xf32>
    %c3_112 = arith.constant 3 : index
    %436 = memref.load %arg1[%c3_112] : memref<9xf32, #tpu.memory_space<smem>>
    %437 = vector.extract_strided_slice %434 {offsets = [0, 0], sizes = [5, 32], strides = [1, 1]} : vector<5x96xf32> to vector<5x32xf32>
    %438 = vector.extract_strided_slice %434 {offsets = [0, 32], sizes = [5, 32], strides = [1, 1]} : vector<5x96xf32> to vector<5x32xf32>
    %439 = vector.extract_strided_slice %434 {offsets = [0, 64], sizes = [5, 32], strides = [1, 1]} : vector<5x96xf32> to vector<5x32xf32>
    %440 = vector.extract_strided_slice %435 {offsets = [0, 0], sizes = [5, 32], strides = [1, 1]} : vector<5x96xf32> to vector<5x32xf32>
    %441 = vector.extract_strided_slice %435 {offsets = [0, 32], sizes = [5, 32], strides = [1, 1]} : vector<5x96xf32> to vector<5x32xf32>
    %442 = vector.extract_strided_slice %435 {offsets = [0, 64], sizes = [5, 32], strides = [1, 1]} : vector<5x96xf32> to vector<5x32xf32>
    %443 = arith.addf %437, %440 : vector<5x32xf32>
    %cst_113 = arith.constant 0.000000e+00 : f32
    %444 = vector.broadcast %cst_113 : f32 to vector<5x32xf32>
    %445 = arith.maximumf %443, %444 : vector<5x32xf32>
    %446 = arith.mulf %438, %441 : vector<5x32xf32>
    %447 = arith.negf %439 : vector<5x32xf32>
    %448 = math.exp %447 : vector<5x32xf32>
    %cst_114 = arith.constant 1.000000e+00 : f32
    %449 = vector.broadcast %cst_114 : f32 to vector<5x32xf32>
    %450 = arith.addf %449, %448 : vector<5x32xf32>
    %451 = arith.divf %449, %450 : vector<5x32xf32>
    %452 = arith.mulf %451, %442 : vector<5x32xf32>
    %453 = vector.broadcast %8 : f32 to vector<5x32xf32>
    %454 = arith.mulf %453, %445 : vector<5x32xf32>
    %455 = vector.broadcast %9 : f32 to vector<5x32xf32>
    %456 = arith.mulf %455, %446 : vector<5x32xf32>
    %457 = arith.addf %454, %456 : vector<5x32xf32>
    %458 = vector.broadcast %10 : f32 to vector<5x32xf32>
    %459 = arith.mulf %458, %452 : vector<5x32xf32>
    %460 = arith.addf %457, %459 : vector<5x32xf32>
    %461 = vector.broadcast %436 : f32 to vector<5x32xf32>
    %462 = arith.mulf %461, %460 : vector<5x32xf32>
    %463 = arith.addf %433, %462 : vector<5x32xf32>
    %c13_115 = arith.constant 13 : index
    %c0_116 = arith.constant 0 : index
    %464 = vector.load %arg9[%c13_115, %c0_116] : memref<20x96xf32, #tpu.memory_space<vmem>>, vector<5x96xf32>
    %c13_117 = arith.constant 13 : index
    %c0_118 = arith.constant 0 : index
    %465 = vector.load %arg10[%c13_117, %c0_118] : memref<20x96xf32, #tpu.memory_space<vmem>>, vector<5x96xf32>
    %c4_119 = arith.constant 4 : index
    %466 = memref.load %arg1[%c4_119] : memref<9xf32, #tpu.memory_space<smem>>
    %467 = vector.extract_strided_slice %464 {offsets = [0, 0], sizes = [5, 32], strides = [1, 1]} : vector<5x96xf32> to vector<5x32xf32>
    %468 = vector.extract_strided_slice %464 {offsets = [0, 32], sizes = [5, 32], strides = [1, 1]} : vector<5x96xf32> to vector<5x32xf32>
    %469 = vector.extract_strided_slice %464 {offsets = [0, 64], sizes = [5, 32], strides = [1, 1]} : vector<5x96xf32> to vector<5x32xf32>
    %470 = vector.extract_strided_slice %465 {offsets = [0, 0], sizes = [5, 32], strides = [1, 1]} : vector<5x96xf32> to vector<5x32xf32>
    %471 = vector.extract_strided_slice %465 {offsets = [0, 32], sizes = [5, 32], strides = [1, 1]} : vector<5x96xf32> to vector<5x32xf32>
    %472 = vector.extract_strided_slice %465 {offsets = [0, 64], sizes = [5, 32], strides = [1, 1]} : vector<5x96xf32> to vector<5x32xf32>
    %473 = arith.addf %467, %470 : vector<5x32xf32>
    %cst_120 = arith.constant 0.000000e+00 : f32
    %474 = vector.broadcast %cst_120 : f32 to vector<5x32xf32>
    %475 = arith.maximumf %473, %474 : vector<5x32xf32>
    %476 = arith.mulf %468, %471 : vector<5x32xf32>
    %477 = arith.negf %469 : vector<5x32xf32>
    %478 = math.exp %477 : vector<5x32xf32>
    %cst_121 = arith.constant 1.000000e+00 : f32
    %479 = vector.broadcast %cst_121 : f32 to vector<5x32xf32>
    %480 = arith.addf %479, %478 : vector<5x32xf32>
    %481 = arith.divf %479, %480 : vector<5x32xf32>
    %482 = arith.mulf %481, %472 : vector<5x32xf32>
    %483 = vector.broadcast %8 : f32 to vector<5x32xf32>
    %484 = arith.mulf %483, %475 : vector<5x32xf32>
    %485 = vector.broadcast %9 : f32 to vector<5x32xf32>
    %486 = arith.mulf %485, %476 : vector<5x32xf32>
    %487 = arith.addf %484, %486 : vector<5x32xf32>
    %488 = vector.broadcast %10 : f32 to vector<5x32xf32>
    %489 = arith.mulf %488, %482 : vector<5x32xf32>
    %490 = arith.addf %487, %489 : vector<5x32xf32>
    %491 = vector.broadcast %466 : f32 to vector<5x32xf32>
    %492 = arith.mulf %491, %490 : vector<5x32xf32>
    %493 = arith.addf %463, %492 : vector<5x32xf32>
    %c15_122 = arith.constant 15 : index
    %c0_123 = arith.constant 0 : index
    %494 = vector.load %arg9[%c15_122, %c0_123] : memref<20x96xf32, #tpu.memory_space<vmem>>, vector<5x96xf32>
    %c13_124 = arith.constant 13 : index
    %c0_125 = arith.constant 0 : index
    %495 = vector.load %arg10[%c13_124, %c0_125] : memref<20x96xf32, #tpu.memory_space<vmem>>, vector<5x96xf32>
    %c5_126 = arith.constant 5 : index
    %496 = memref.load %arg1[%c5_126] : memref<9xf32, #tpu.memory_space<smem>>
    %497 = vector.extract_strided_slice %494 {offsets = [0, 0], sizes = [5, 32], strides = [1, 1]} : vector<5x96xf32> to vector<5x32xf32>
    %498 = vector.extract_strided_slice %494 {offsets = [0, 32], sizes = [5, 32], strides = [1, 1]} : vector<5x96xf32> to vector<5x32xf32>
    %499 = vector.extract_strided_slice %494 {offsets = [0, 64], sizes = [5, 32], strides = [1, 1]} : vector<5x96xf32> to vector<5x32xf32>
    %500 = vector.extract_strided_slice %495 {offsets = [0, 0], sizes = [5, 32], strides = [1, 1]} : vector<5x96xf32> to vector<5x32xf32>
    %501 = vector.extract_strided_slice %495 {offsets = [0, 32], sizes = [5, 32], strides = [1, 1]} : vector<5x96xf32> to vector<5x32xf32>
    %502 = vector.extract_strided_slice %495 {offsets = [0, 64], sizes = [5, 32], strides = [1, 1]} : vector<5x96xf32> to vector<5x32xf32>
    %503 = arith.addf %497, %500 : vector<5x32xf32>
    %cst_127 = arith.constant 0.000000e+00 : f32
    %504 = vector.broadcast %cst_127 : f32 to vector<5x32xf32>
    %505 = arith.maximumf %503, %504 : vector<5x32xf32>
    %506 = arith.mulf %498, %501 : vector<5x32xf32>
    %507 = arith.negf %499 : vector<5x32xf32>
    %508 = math.exp %507 : vector<5x32xf32>
    %cst_128 = arith.constant 1.000000e+00 : f32
    %509 = vector.broadcast %cst_128 : f32 to vector<5x32xf32>
    %510 = arith.addf %509, %508 : vector<5x32xf32>
    %511 = arith.divf %509, %510 : vector<5x32xf32>
    %512 = arith.mulf %511, %502 : vector<5x32xf32>
    %513 = vector.broadcast %8 : f32 to vector<5x32xf32>
    %514 = arith.mulf %513, %505 : vector<5x32xf32>
    %515 = vector.broadcast %9 : f32 to vector<5x32xf32>
    %516 = arith.mulf %515, %506 : vector<5x32xf32>
    %517 = arith.addf %514, %516 : vector<5x32xf32>
    %518 = vector.broadcast %10 : f32 to vector<5x32xf32>
    %519 = arith.mulf %518, %512 : vector<5x32xf32>
    %520 = arith.addf %517, %519 : vector<5x32xf32>
    %521 = vector.broadcast %496 : f32 to vector<5x32xf32>
    %522 = arith.mulf %521, %520 : vector<5x32xf32>
    %523 = arith.addf %493, %522 : vector<5x32xf32>
    %c11_129 = arith.constant 11 : index
    %c0_130 = arith.constant 0 : index
    %524 = vector.load %arg9[%c11_129, %c0_130] : memref<20x96xf32, #tpu.memory_space<vmem>>, vector<5x96xf32>
    %c15_131 = arith.constant 15 : index
    %c0_132 = arith.constant 0 : index
    %525 = vector.load %arg10[%c15_131, %c0_132] : memref<20x96xf32, #tpu.memory_space<vmem>>, vector<5x96xf32>
    %c6_133 = arith.constant 6 : index
    %526 = memref.load %arg1[%c6_133] : memref<9xf32, #tpu.memory_space<smem>>
    %527 = vector.extract_strided_slice %524 {offsets = [0, 0], sizes = [5, 32], strides = [1, 1]} : vector<5x96xf32> to vector<5x32xf32>
    %528 = vector.extract_strided_slice %524 {offsets = [0, 32], sizes = [5, 32], strides = [1, 1]} : vector<5x96xf32> to vector<5x32xf32>
    %529 = vector.extract_strided_slice %524 {offsets = [0, 64], sizes = [5, 32], strides = [1, 1]} : vector<5x96xf32> to vector<5x32xf32>
    %530 = vector.extract_strided_slice %525 {offsets = [0, 0], sizes = [5, 32], strides = [1, 1]} : vector<5x96xf32> to vector<5x32xf32>
    %531 = vector.extract_strided_slice %525 {offsets = [0, 32], sizes = [5, 32], strides = [1, 1]} : vector<5x96xf32> to vector<5x32xf32>
    %532 = vector.extract_strided_slice %525 {offsets = [0, 64], sizes = [5, 32], strides = [1, 1]} : vector<5x96xf32> to vector<5x32xf32>
    %533 = arith.addf %527, %530 : vector<5x32xf32>
    %cst_134 = arith.constant 0.000000e+00 : f32
    %534 = vector.broadcast %cst_134 : f32 to vector<5x32xf32>
    %535 = arith.maximumf %533, %534 : vector<5x32xf32>
    %536 = arith.mulf %528, %531 : vector<5x32xf32>
    %537 = arith.negf %529 : vector<5x32xf32>
    %538 = math.exp %537 : vector<5x32xf32>
    %cst_135 = arith.constant 1.000000e+00 : f32
    %539 = vector.broadcast %cst_135 : f32 to vector<5x32xf32>
    %540 = arith.addf %539, %538 : vector<5x32xf32>
    %541 = arith.divf %539, %540 : vector<5x32xf32>
    %542 = arith.mulf %541, %532 : vector<5x32xf32>
    %543 = vector.broadcast %8 : f32 to vector<5x32xf32>
    %544 = arith.mulf %543, %535 : vector<5x32xf32>
    %545 = vector.broadcast %9 : f32 to vector<5x32xf32>
    %546 = arith.mulf %545, %536 : vector<5x32xf32>
    %547 = arith.addf %544, %546 : vector<5x32xf32>
    %548 = vector.broadcast %10 : f32 to vector<5x32xf32>
    %549 = arith.mulf %548, %542 : vector<5x32xf32>
    %550 = arith.addf %547, %549 : vector<5x32xf32>
    %551 = vector.broadcast %526 : f32 to vector<5x32xf32>
    %552 = arith.mulf %551, %550 : vector<5x32xf32>
    %553 = arith.addf %523, %552 : vector<5x32xf32>
    %c13_136 = arith.constant 13 : index
    %c0_137 = arith.constant 0 : index
    %554 = vector.load %arg9[%c13_136, %c0_137] : memref<20x96xf32, #tpu.memory_space<vmem>>, vector<5x96xf32>
    %c15_138 = arith.constant 15 : index
    %c0_139 = arith.constant 0 : index
    %555 = vector.load %arg10[%c15_138, %c0_139] : memref<20x96xf32, #tpu.memory_space<vmem>>, vector<5x96xf32>
    %c7_140 = arith.constant 7 : index
    %556 = memref.load %arg1[%c7_140] : memref<9xf32, #tpu.memory_space<smem>>
    %557 = vector.extract_strided_slice %554 {offsets = [0, 0], sizes = [5, 32], strides = [1, 1]} : vector<5x96xf32> to vector<5x32xf32>
    %558 = vector.extract_strided_slice %554 {offsets = [0, 32], sizes = [5, 32], strides = [1, 1]} : vector<5x96xf32> to vector<5x32xf32>
    %559 = vector.extract_strided_slice %554 {offsets = [0, 64], sizes = [5, 32], strides = [1, 1]} : vector<5x96xf32> to vector<5x32xf32>
    %560 = vector.extract_strided_slice %555 {offsets = [0, 0], sizes = [5, 32], strides = [1, 1]} : vector<5x96xf32> to vector<5x32xf32>
    %561 = vector.extract_strided_slice %555 {offsets = [0, 32], sizes = [5, 32], strides = [1, 1]} : vector<5x96xf32> to vector<5x32xf32>
    %562 = vector.extract_strided_slice %555 {offsets = [0, 64], sizes = [5, 32], strides = [1, 1]} : vector<5x96xf32> to vector<5x32xf32>
    %563 = arith.addf %557, %560 : vector<5x32xf32>
    %cst_141 = arith.constant 0.000000e+00 : f32
    %564 = vector.broadcast %cst_141 : f32 to vector<5x32xf32>
    %565 = arith.maximumf %563, %564 : vector<5x32xf32>
    %566 = arith.mulf %558, %561 : vector<5x32xf32>
    %567 = arith.negf %559 : vector<5x32xf32>
    %568 = math.exp %567 : vector<5x32xf32>
    %cst_142 = arith.constant 1.000000e+00 : f32
    %569 = vector.broadcast %cst_142 : f32 to vector<5x32xf32>
    %570 = arith.addf %569, %568 : vector<5x32xf32>
    %571 = arith.divf %569, %570 : vector<5x32xf32>
    %572 = arith.mulf %571, %562 : vector<5x32xf32>
    %573 = vector.broadcast %8 : f32 to vector<5x32xf32>
    %574 = arith.mulf %573, %565 : vector<5x32xf32>
    %575 = vector.broadcast %9 : f32 to vector<5x32xf32>
    %576 = arith.mulf %575, %566 : vector<5x32xf32>
    %577 = arith.addf %574, %576 : vector<5x32xf32>
    %578 = vector.broadcast %10 : f32 to vector<5x32xf32>
    %579 = arith.mulf %578, %572 : vector<5x32xf32>
    %580 = arith.addf %577, %579 : vector<5x32xf32>
    %581 = vector.broadcast %556 : f32 to vector<5x32xf32>
    %582 = arith.mulf %581, %580 : vector<5x32xf32>
    %583 = arith.addf %553, %582 : vector<5x32xf32>
    %c15_143 = arith.constant 15 : index
    %c0_144 = arith.constant 0 : index
    %584 = vector.load %arg9[%c15_143, %c0_144] : memref<20x96xf32, #tpu.memory_space<vmem>>, vector<5x96xf32>
    %c15_145 = arith.constant 15 : index
    %c0_146 = arith.constant 0 : index
    %585 = vector.load %arg10[%c15_145, %c0_146] : memref<20x96xf32, #tpu.memory_space<vmem>>, vector<5x96xf32>
    %c8_147 = arith.constant 8 : index
    %586 = memref.load %arg1[%c8_147] : memref<9xf32, #tpu.memory_space<smem>>
    %587 = vector.extract_strided_slice %584 {offsets = [0, 0], sizes = [5, 32], strides = [1, 1]} : vector<5x96xf32> to vector<5x32xf32>
    %588 = vector.extract_strided_slice %584 {offsets = [0, 32], sizes = [5, 32], strides = [1, 1]} : vector<5x96xf32> to vector<5x32xf32>
    %589 = vector.extract_strided_slice %584 {offsets = [0, 64], sizes = [5, 32], strides = [1, 1]} : vector<5x96xf32> to vector<5x32xf32>
    %590 = vector.extract_strided_slice %585 {offsets = [0, 0], sizes = [5, 32], strides = [1, 1]} : vector<5x96xf32> to vector<5x32xf32>
    %591 = vector.extract_strided_slice %585 {offsets = [0, 32], sizes = [5, 32], strides = [1, 1]} : vector<5x96xf32> to vector<5x32xf32>
    %592 = vector.extract_strided_slice %585 {offsets = [0, 64], sizes = [5, 32], strides = [1, 1]} : vector<5x96xf32> to vector<5x32xf32>
    %593 = arith.addf %587, %590 : vector<5x32xf32>
    %cst_148 = arith.constant 0.000000e+00 : f32
    %594 = vector.broadcast %cst_148 : f32 to vector<5x32xf32>
    %595 = arith.maximumf %593, %594 : vector<5x32xf32>
    %596 = arith.mulf %588, %591 : vector<5x32xf32>
    %597 = arith.negf %589 : vector<5x32xf32>
    %598 = math.exp %597 : vector<5x32xf32>
    %cst_149 = arith.constant 1.000000e+00 : f32
    %599 = vector.broadcast %cst_149 : f32 to vector<5x32xf32>
    %600 = arith.addf %599, %598 : vector<5x32xf32>
    %601 = arith.divf %599, %600 : vector<5x32xf32>
    %602 = arith.mulf %601, %592 : vector<5x32xf32>
    %603 = vector.broadcast %8 : f32 to vector<5x32xf32>
    %604 = arith.mulf %603, %595 : vector<5x32xf32>
    %605 = vector.broadcast %9 : f32 to vector<5x32xf32>
    %606 = arith.mulf %605, %596 : vector<5x32xf32>
    %607 = arith.addf %604, %606 : vector<5x32xf32>
    %608 = vector.broadcast %10 : f32 to vector<5x32xf32>
    %609 = arith.mulf %608, %602 : vector<5x32xf32>
    %610 = arith.addf %607, %609 : vector<5x32xf32>
    %611 = vector.broadcast %586 : f32 to vector<5x32xf32>
    %612 = arith.mulf %611, %610 : vector<5x32xf32>
    %613 = arith.addf %583, %612 : vector<5x32xf32>
    %614 = vector.broadcast %11 : f32 to vector<10x32xf32>
    %615 = arith.mulf %614, %342 : vector<10x32xf32>
    %cst_150 = arith.constant dense<0.000000e+00> : vector<10x32xf32>
    %616 = tpu.matmul %12, %613, %cst_150 {dimension_numbers = #tpu.dot_dimension_numbers<[1], [0], [0], [1], [0, 0, 1, 1], [], []>} : vector<10x5xf32>, vector<5x32xf32>, vector<10x32xf32> -> vector<10x32xf32>
    %617 = arith.addf %615, %616 : vector<10x32xf32>
    %c1_151 = arith.constant 1 : index
    %c0_152 = arith.constant 0 : index
    %c0_153 = arith.constant 0 : index
    %618 = vector.load %arg8[%c1_151, %c0_152, %c0_153] : memref<2x10x32xf32, #tpu.memory_space<vmem>>, vector<1x10x32xf32>
    %619 = vector.shape_cast %618 : vector<1x10x32xf32> to vector<10x32xf32>
    %620 = vector.shape_cast %617 : vector<10x32xf32> to vector<1x10x32xf32>
    tpu.vector_store %arg8[%c1_151, %c0_152, %c0_153], %620 {strides = array<i32>} : memref<2x10x32xf32, #tpu.memory_space<vmem>>, vector<1x10x32xf32>,
    return
  }
}

</mosaic_0001>

<llo_original>
// kernel: forward.1
$region0: #{forward.1}
  #allocation0 [shape = 'u32[]', space=smem, size = 0x4, offset = 0x4, fixed_abs, tag = 'smem constant byte address 0x4 - core index']
  #allocation1 [shape = 'u32[144,128]{1,0:T(1,128)}', space=vmem, size = 0x12000, scoped, tag = 'internal scratch']
  #allocation2 [shape = 'f32[20,96]{1,0:T(8,128)}', space=vmem, size = 0x3000, scoped, tag = 'scratch operand']
  #allocation3 [shape = 'f32[20,96]{1,0:T(8,128)}', space=vmem, size = 0x3000, scoped, tag = 'scratch operand']
  #allocation4 [shape = 'f32[1]{0:T(128)S(6)}', space=smem, size = 0x200, scoped, tag = 'scoped memory for forward.1']
  %s0 = inlined_call_operand.vmem [shape: f32[3], index: 0, kind: input, shape index: {}]
  %s1 = inlined_call_operand.vmem [shape: f32[9], index: 1, kind: input, shape index: {}]
  %s2 = inlined_call_operand.<no memory space> [shape: f32[1], index: 2, kind: input, shape index: {}]
  %s3 = inlined_call_operand.vmem [shape: f32[20,32], index: 3, kind: input, shape index: {}]
  %s4 = inlined_call_operand.vmem [shape: f32[20,32], index: 4, kind: input, shape index: {}]
  %s5 = inlined_call_operand.vmem [shape: f32[32,96], index: 5, kind: input, shape index: {}]
  %s6 = inlined_call_operand.vmem [shape: f32[32,96], index: 6, kind: input, shape index: {}]
  %s7 = inlined_call_operand.vmem [shape: f32[10,5], index: 7, kind: input, shape index: {}]
  %s8 = inlined_call_operand.vmem [shape: f32[2,10,32], index: 8, kind: output, shape index: {}]
  %s9 = sld [smem:[#allocation0]]
  $region50: #{forward.1} parent=0
    _
  %s11 = ssub.s32 1, %s9
  %s12 = scalar_select 0, %s11, %s9
  %13 = sst [smem:[#allocation4]] %s2
  $region1: #{forward.1} parent=0
    #allocation5 [shape = 'u8[512]{0}', space=smem, size = 0x200, scoped, tag = 'input window, operand 0, single buffered']
    #allocation6 [shape = 's32[1]{0}', space=sflag, size = 0x4, scoped, tag = 'scoped memory for forward.1']
    #allocation7 [shape = 'u8[512]{0}', space=smem, size = 0x200, scoped, tag = 'input window, operand 1, single buffered']
    #allocation8 [shape = 's32[1]{0}', space=sflag, size = 0x4, scoped, tag = 'scoped memory for forward.1']
    %14 = vsyncpa [#allocation6], 0
    %15 = vsyncpa [#allocation8], 0
    // Predicated region
    $region2: #{forward.1} parent=1 // pred_check
      _
    $region3: #{forward.1} parent=1 // pred_check_branch
      %17 = sbr.rel (0) target = $region5
    $region4: #{forward.1} parent=1 // pred_region
      %s19 = ssub.s32 16, 16
      %20 = vsyncadd [#allocation6], %s19
      %s22 = sshll.u32 %s0, 4
      %s23 = int_to_ptr.vmem [resolvable:$true] %s22
      %25 = dma.vmem_to_smem %s23, 16, [#allocation5], [#allocation6]
    $region5: #{forward.1} parent=1 // pred_fallthru
      _
    // Predicated region
    $region6: #{forward.1} parent=1 // pred_check
      _
    $region7: #{forward.1} parent=1 // pred_check_branch
      %27 = sbr.rel (0) target = $region9
    $region8: #{forward.1} parent=1 // pred_region
      %s29 = ssub.s32 16, 16
      %30 = vsyncadd [#allocation8], %s29
      %s32 = sshll.u32 %s1, 4
      %s33 = int_to_ptr.vmem [resolvable:$true] %s32
      %35 = dma.vmem_to_smem %s33, 16, [#allocation7], [#allocation8]
    $region9: #{forward.1} parent=1 // pred_fallthru
      _
    // Predicated region
    $region10: #{forward.1} parent=1 // pred_check
      _
    $region11: #{forward.1} parent=1 // pred_check_branch
      %37 = sbr.rel (0) target = $region13
    $region12: #{forward.1} parent=1 // pred_region
      _
    $region13: #{forward.1} parent=1 // pred_fallthru
      _
    // Predicated region
    $region14: #{forward.1} parent=1 // pred_check
      _
    $region15: #{forward.1} parent=1 // pred_check_branch
      %39 = sbr.rel (0) target = $region17
    $region16: #{forward.1} parent=1 // pred_region
      _
    $region17: #{forward.1} parent=1 // pred_fallthru
      _
    // Predicated region
    $region18: #{forward.1} parent=1 // pred_check
      _
    $region19: #{forward.1} parent=1 // pred_check_branch
      %41 = sbr.rel (0) target = $region21
    $region20: #{forward.1} parent=1 // pred_region
      _
    $region21: #{forward.1} parent=1 // pred_fallthru
      _
    // Predicated region
    $region22: #{forward.1} parent=1 // pred_check
      _
    $region23: #{forward.1} parent=1 // pred_check_branch
      %43 = sbr.rel (0) target = $region25
    $region24: #{forward.1} parent=1 // pred_region
      _
    $region25: #{forward.1} parent=1 // pred_fallthru
      _
    // Predicated region
    $region26: #{forward.1} parent=1 // pred_check
      _
    $region27: #{forward.1} parent=1 // pred_check_branch
      %45 = sbr.rel (0) target = $region29
    $region28: #{forward.1} parent=1 // pred_region
      _
    $region29: #{forward.1} parent=1 // pred_fallthru
      _
    // Predicated region
    $region30: #{forward.1} parent=1 // pred_check
      _
    $region31: #{forward.1} parent=1 // pred_check_branch
      %47 = sbr.rel (0) target = $region33
    $region32: #{forward.1} parent=1 // pred_region
      _
    $region33: #{forward.1} parent=1 // pred_fallthru
      _
    // Predicated region
    $region34: #{forward.1} parent=1 // pred_check
      _
    $region35: #{forward.1} parent=1 // pred_check_branch
      %49 = sbr.rel (0) target = $region37
    $region36: #{forward.1} parent=1 // pred_region
      %50 = dma.done [#allocation6], 16
    $region37: #{forward.1} parent=1 // pred_fallthru
      _
    // Predicated region
    $region38: #{forward.1} parent=1 // pred_check
      _
    $region39: #{forward.1} parent=1 // pred_check_branch
      %52 = sbr.rel (0) target = $region41
    $region40: #{forward.1} parent=1 // pred_region
      %53 = dma.done [#allocation8], 16
    $region41: #{forward.1} parent=1 // pred_fallthru
      _
    %54 = sfence
    %v55 = vld [vmem:[%s3] sm:$0xff]
    %v56 = vld [vmem:[%s3 + $0x8] sm:$0xff]
    %v57 = vld [vmem:[%s3 + $0x10] sm:$0xf]
    %v58 = vld [vmem:[%s5] sm:$0xff]
    %v59 = vld [vmem:[%s5 + $0x8] sm:$0xff]
    %v60 = vld [vmem:[%s5 + $0x10] sm:$0xff]
    %v61 = vld [vmem:[%s5 + $0x18] sm:$0xff]
    %vm62 = vcmask 261120
    %v64 = vsel %vm62, %v55, 0
    %v67 = vsel %vm62, %v56, 0
    %v70 = vsel %vm62, %v57, 0
    %72 = vmatprep.subr.mxu0 0.0
    %73 = vmatpush1.msra.mxu0 %v58
    %74 = vmatprep.subr.mxu0 0.0
    %75 = vmatpush1.msra.mxu0 %v59
    %76 = vmatprep.subr.mxu0 0.0
    %77 = vmatpush1.msra.mxu0 %v60
    %78 = vmatprep.subr.mxu0 0.0
    %79 = vmatpush1.msra.mxu0 %v61
    %80 = vmatprep.subr.mxu0 0.0
    %81 = vmatpush1.msra.mxu0 0.0
    %82 = vmatprep.subr.mxu0 0.0
    %83 = vmatpush1.msra.mxu0 0.0
    %84 = vmatprep.subr.mxu0 0.0
    %85 = vmatpush1.msra.mxu0 0.0
    %86 = vmatprep.subr.mxu0 0.0
    %87 = vmatpush1.msra.mxu0 0.0
    %88 = vmatprep.subr.mxu0 0.0
    %89 = vmatpush1.msra.mxu0 0.0
    %90 = vmatprep.subr.mxu0 0.0
    %91 = vmatpush1.msra.mxu0 0.0
    %92 = vmatprep.subr.mxu0 0.0
    %93 = vmatpush1.msra.mxu0 0.0
    %94 = vmatprep.subr.mxu0 0.0
    %95 = vmatpush1.msra.mxu0 0.0
    %96 = vmatprep.subr.mxu0 0.0
    %97 = vmatpush1.msra.mxu0 0.0
    %98 = vmatprep.subr.mxu0 0.0
    %99 = vmatpush1.msra.mxu0 0.0
    %100 = vmatprep.subr.mxu0 0.0
    %101 = vmatpush1.msra.mxu0 0.0
    %102 = vmatprep.subr.mxu0 0.0
    %103 = vmatpush1.msra.mxu0 0.0
    %104 = vmatprep.subr.mxu0 0.0
    %105 = vmatpush1.msra.mxu0 0.0
    %106 = vmatprep.subr.mxu0 0.0
    %107 = vmatpush1.msra.mxu0 0.0
    %108 = vmatprep.subr.mxu0 0.0
    %109 = vmatpush1.msra.mxu0 0.0
    %110 = vmatprep.subr.mxu0 0.0
    %111 = vmatpush1.msra.mxu0 0.0
    %112 = vmatprep.subr.mxu0 0.0
    %113 = vmatpush1.msra.mxu0 0.0
    %114 = vmatprep.subr.mxu0 0.0
    %115 = vmatpush1.msra.mxu0 0.0
    %116 = vmatprep.subr.mxu0 0.0
    %117 = vmatpush1.msra.mxu0 0.0
    %118 = vmatprep.subr.mxu0 0.0
    %119 = vmatpush1.msra.mxu0 0.0
    %120 = vmatprep.subr.mxu0 0.0
    %121 = vmatpush1.msra.mxu0 0.0
    %122 = vmatprep.subr.mxu0 0.0
    %123 = vmatpush1.msra.mxu0 0.0
    %124 = vmatprep.subr.mxu0 0.0
    %125 = vmatpush1.msra.mxu0 0.0
    %126 = vmatprep.subr.mxu0 0.0
    %127 = vmatpush1.msra.mxu0 0.0
    %128 = vmatprep.subr.mxu0 0.0
    %129 = vmatpush1.msra.mxu0 0.0
    %130 = vmatprep.subr.mxu0 0.0
    %131 = vmatpush1.msra.mxu0 0.0
    %132 = vmatprep.subr.mxu0 0.0
    %133 = vmatpush1.msra.mxu0 0.0
    %134 = vmatprep.subr.mxu0 0.0
    %135 = vmatpush1.msra.mxu0 0.0
    %136 = vmatprep.mubr.f32.mxu0 0.0
    %137 = vmatmul.mubr.f32.gmra.mrb[0].mxu0 %v64
    %v138 = vpop.f32.mrb[0].mxu0
    %v139 = vadd.f32 0.0, %v138
    %v140 = vpop.f32.mrb[0].mxu0
    %141 = vmatprep.mubr.f32.mxu0 0.0
    %142 = vmatmul.mubr.f32.gmra.mrb[0].mxu0 %v67
    %v143 = vpop.f32.mrb[0].mxu0
    %v144 = vadd.f32 0.0, %v143
    %v145 = vpop.f32.mrb[0].mxu0
    %146 = vmatprep.mubr.f32.mxu0 0.0
    %147 = vmatmul.mubr.f32.gmra.mrb[0].mxu0 %v70
    %v148 = vpop.f32.mrb[0].mxu0
    %v149 = vadd.f32 0.0, %v148
    %v150 = vpop.f32.mrb[0].mxu0
    %151 = vdwg.mxu0
    %vm152 = vcmask 785408
    %153 = vst.msk [vmem:[#allocation2] sm:$0xff] %vm152, %v139
    %154 = vst.msk [vmem:[#allocation2 + $0x8] sm:$0xff] %vm152, %v144
    %vm155 = vcmask 781312
    %156 = vst.msk [vmem:[#allocation2 + $0x10] sm:$0xf] %vm155, %v149
    %v157 = vld [vmem:[%s4] sm:$0xff]
    %v158 = vld [vmem:[%s4 + $0x8] sm:$0xff]
    %v159 = vld [vmem:[%s4 + $0x10] sm:$0xf]
    %v160 = vld [vmem:[%s6] sm:$0xff]
    %v161 = vld [vmem:[%s6 + $0x8] sm:$0xff]
    %v162 = vld [vmem:[%s6 + $0x10] sm:$0xff]
    %v163 = vld [vmem:[%s6 + $0x18] sm:$0xff]
    %v165 = vsel %vm62, %v157, 0
    %v168 = vsel %vm62, %v158, 0
    %v171 = vsel %vm62, %v159, 0
    %173 = vmatprep.subr.mxu0 0.0
    %174 = vmatpush1.msra.mxu0 %v160
    %175 = vmatprep.subr.mxu0 0.0
    %176 = vmatpush1.msra.mxu0 %v161
    %177 = vmatprep.subr.mxu0 0.0
    %178 = vmatpush1.msra.mxu0 %v162
    %179 = vmatprep.subr.mxu0 0.0
    %180 = vmatpush1.msra.mxu0 %v163
    %181 = vmatprep.subr.mxu0 0.0
    %182 = vmatpush1.msra.mxu0 0.0
    %183 = vmatprep.subr.mxu0 0.0
    %184 = vmatpush1.msra.mxu0 0.0
    %185 = vmatprep.subr.mxu0 0.0
    %186 = vmatpush1.msra.mxu0 0.0
    %187 = vmatprep.subr.mxu0 0.0
    %188 = vmatpush1.msra.mxu0 0.0
    %189 = vmatprep.subr.mxu0 0.0
    %190 = vmatpush1.msra.mxu0 0.0
    %191 = vmatprep.subr.mxu0 0.0
    %192 = vmatpush1.msra.mxu0 0.0
    %193 = vmatprep.subr.mxu0 0.0
    %194 = vmatpush1.msra.mxu0 0.0
    %195 = vmatprep.subr.mxu0 0.0
    %196 = vmatpush1.msra.mxu0 0.0
    %197 = vmatprep.subr.mxu0 0.0
    %198 = vmatpush1.msra.mxu0 0.0
    %199 = vmatprep.subr.mxu0 0.0
    %200 = vmatpush1.msra.mxu0 0.0
    %201 = vmatprep.subr.mxu0 0.0
    %202 = vmatpush1.msra.mxu0 0.0
    %203 = vmatprep.subr.mxu0 0.0
    %204 = vmatpush1.msra.mxu0 0.0
    %205 = vmatprep.subr.mxu0 0.0
    %206 = vmatpush1.msra.mxu0 0.0
    %207 = vmatprep.subr.mxu0 0.0
    %208 = vmatpush1.msra.mxu0 0.0
    %209 = vmatprep.subr.mxu0 0.0
    %210 = vmatpush1.msra.mxu0 0.0
    %211 = vmatprep.subr.mxu0 0.0
    %212 = vmatpush1.msra.mxu0 0.0
    %213 = vmatprep.subr.mxu0 0.0
    %214 = vmatpush1.msra.mxu0 0.0
    %215 = vmatprep.subr.mxu0 0.0
    %216 = vmatpush1.msra.mxu0 0.0
    %217 = vmatprep.subr.mxu0 0.0
    %218 = vmatpush1.msra.mxu0 0.0
    %219 = vmatprep.subr.mxu0 0.0
    %220 = vmatpush1.msra.mxu0 0.0
    %221 = vmatprep.subr.mxu0 0.0
    %222 = vmatpush1.msra.mxu0 0.0
    %223 = vmatprep.subr.mxu0 0.0
    %224 = vmatpush1.msra.mxu0 0.0
    %225 = vmatprep.subr.mxu0 0.0
    %226 = vmatpush1.msra.mxu0 0.0
    %227 = vmatprep.subr.mxu0 0.0
    %228 = vmatpush1.msra.mxu0 0.0
    %229 = vmatprep.subr.mxu0 0.0
    %230 = vmatpush1.msra.mxu0 0.0
    %231 = vmatprep.subr.mxu0 0.0
    %232 = vmatpush1.msra.mxu0 0.0
    %233 = vmatprep.subr.mxu0 0.0
    %234 = vmatpush1.msra.mxu0 0.0
    %235 = vmatprep.subr.mxu0 0.0
    %236 = vmatpush1.msra.mxu0 0.0
    %237 = vmatprep.mubr.f32.mxu0 0.0
    %238 = vmatmul.mubr.f32.gmra.mrb[0].mxu0 %v165
    %v239 = vpop.f32.mrb[0].mxu0
    %v240 = vadd.f32 0.0, %v239
    %v241 = vpop.f32.mrb[0].mxu0
    %242 = vmatprep.mubr.f32.mxu0 0.0
    %243 = vmatmul.mubr.f32.gmra.mrb[0].mxu0 %v168
    %v244 = vpop.f32.mrb[0].mxu0
    %v245 = vadd.f32 0.0, %v244
    %v246 = vpop.f32.mrb[0].mxu0
    %247 = vmatprep.mubr.f32.mxu0 0.0
    %248 = vmatmul.mubr.f32.gmra.mrb[0].mxu0 %v171
    %v249 = vpop.f32.mrb[0].mxu0
    %v250 = vadd.f32 0.0, %v249
    %v251 = vpop.f32.mrb[0].mxu0
    %252 = vdwg.mxu0
    %253 = vst.msk [vmem:[#allocation3] sm:$0xff] %vm152, %v240
    %254 = vst.msk [vmem:[#allocation3 + $0x8] sm:$0xff] %vm152, %v245
    %255 = vst.msk [vmem:[#allocation3 + $0x10] sm:$0xf] %vm155, %v250
    %s256 = sld [smem:[#allocation5]]
    %s257 = sld [smem:[#allocation5 + $0x1]]
    %s258 = sld [smem:[#allocation5 + $0x2]]
    %s259 = sld [smem:[#allocation4]]
    %v260 = vld [vmem:[%s7] sm:$0xff]
    %v261 = vld [vmem:[%s7 + $0x8] sm:$0x3]
    %v262 = vld [vmem:[#allocation2] sm:$0xff]
    %v263 = vld [vmem:[#allocation2 + $0x8] sm:$0x3]
    %v264 = vld [vmem:[#allocation3] sm:$0xff]
    %v265 = vld [vmem:[#allocation3 + $0x8] sm:$0x3]
    %v266 = vadd.f32 %v262, %v264
    %v267 = vadd.f32 %v263, %v265
    %v268 = vmax.f32 %v266, 0.0
    %v269 = vmax.f32 %v267, 0.0
    %v270 = vmul.f32 %v262, %v264
    %v271 = vmul.f32 %v263, %v265
    %v272 = vxor.u32 %v262, 2147483648
    %v273 = vxor.u32 %v263, 2147483648
    %v274 = vmul.f32 %v272, 1.442695
    %v275 = vpow.pop %v274
    %v276 = vmul.f32 %v273, 1.442695
    %v277 = vpow.pop %v276
    %v278 = vadd.f32 %v275, 1.0
    %v279 = vadd.f32 %v277, 1.0
    %v280 = vrcp.pop %v278
    %v281 = vmul.f32 1.0, %v280
    %v282 = vrcp.pop %v279
    %v283 = vmul.f32 1.0, %v282
    %v284 = vmul.f32 %v281, %v264
    %v285 = vmul.f32 %v283, %v265
    %v286 = vstv %s256
    %v287 = vmul.f32 %v286, %v268
    %v288 = vmul.f32 %v286, %v269
    %v289 = vstv %s257
    %v290 = vmul.f32 %v289, %v270
    %v291 = vmul.f32 %v289, %v271
    %294 = vrot.lane.b32.xlu0 %v290, 96
    %v295 = vpop.permute.xlu0 %294
    %296 = vrot.lane.b32.xlu0 %v291, 96
    %v297 = vpop.permute.xlu0 %296
    %v300 = vadd.f32 %v287, %v295
    %v301 = vadd.f32 %v288, %v297
    %v302 = vstv %s258
    %v303 = vmul.f32 %v302, %v284
    %v304 = vmul.f32 %v302, %v285
    %307 = vrot.lane.b32.xlu0 %v303, 64
    %v308 = vpop.permute.xlu0 %307
    %309 = vrot.lane.b32.xlu0 %v304, 64
    %v310 = vpop.permute.xlu0 %309
    %v313 = vadd.f32 %v300, %v308
    %v314 = vadd.f32 %v301, %v310
    %v315 = vld [vmem:[#allocation2 + $0x1] sm:$0x1f]
    %v316 = vld [vmem:[#allocation3 + $0x1] sm:$0x1f]
    %s317 = sld [smem:[#allocation7]]
    %v318 = vadd.f32 %v315, %v316
    %v319 = vmax.f32 %v318, 0.0
    %v320 = vmul.f32 %v315, %v316
    %v321 = vxor.u32 %v315, 2147483648
    %v322 = vmul.f32 %v321, 1.442695
    %v323 = vpow.pop %v322
    %v324 = vadd.f32 %v323, 1.0
    %v325 = vrcp.pop %v324
    %v326 = vmul.f32 1.0, %v325
    %v327 = vmul.f32 %v326, %v316
    %v328 = vmul.f32 %v286, %v319
    %v329 = vmul.f32 %v289, %v320
    %331 = vrot.lane.b32.xlu0 %v329, 96
    %v332 = vpop.permute.xlu0 %331
    %v334 = vadd.f32 %v328, %v332
    %v335 = vmul.f32 %v302, %v327
    %337 = vrot.lane.b32.xlu0 %v335, 64
    %v338 = vpop.permute.xlu0 %337
    %v340 = vadd.f32 %v334, %v338
    %v341 = vstv %s317
    %v342 = vmul.f32 %v341, %v340
    %v343 = vadd.f32 %v342, 0.0
    %v344 = vld [vmem:[#allocation2 + $0x3] sm:$0x1f]
    %s345 = sld [smem:[#allocation7 + $0x1]]
    %v346 = vadd.f32 %v344, %v316
    %v347 = vmax.f32 %v346, 0.0
    %v348 = vmul.f32 %v344, %v316
    %v349 = vxor.u32 %v344, 2147483648
    %v350 = vmul.f32 %v349, 1.442695
    %v351 = vpow.pop %v350
    %v352 = vadd.f32 %v351, 1.0
    %v353 = vrcp.pop %v352
    %v354 = vmul.f32 1.0, %v353
    %v355 = vmul.f32 %v354, %v316
    %v356 = vmul.f32 %v286, %v347
    %v357 = vmul.f32 %v289, %v348
    %359 = vrot.lane.b32.xlu0 %v357, 96
    %v360 = vpop.permute.xlu0 %359
    %v362 = vadd.f32 %v356, %v360
    %v363 = vmul.f32 %v302, %v355
    %365 = vrot.lane.b32.xlu0 %v363, 64
    %v366 = vpop.permute.xlu0 %365
    %v368 = vadd.f32 %v362, %v366
    %v369 = vstv %s345
    %v370 = vmul.f32 %v369, %v368
    %v371 = vadd.f32 %v343, %v370
    %v372 = vld [vmem:[#allocation2 + $0x5] sm:$0x1f]
    %s373 = sld [smem:[#allocation7 + $0x2]]
    %v374 = vadd.f32 %v372, %v316
    %v375 = vmax.f32 %v374, 0.0
    %v376 = vmul.f32 %v372, %v316
    %v377 = vxor.u32 %v372, 2147483648
    %v378 = vmul.f32 %v377, 1.442695
    %v379 = vpow.pop %v378
    %v380 = vadd.f32 %v379, 1.0
    %v381 = vrcp.pop %v380
    %v382 = vmul.f32 1.0, %v381
    %v383 = vmul.f32 %v382, %v316
    %v384 = vmul.f32 %v286, %v375
    %v385 = vmul.f32 %v289, %v376
    %387 = vrot.lane.b32.xlu0 %v385, 96
    %v388 = vpop.permute.xlu0 %387
    %v390 = vadd.f32 %v384, %v388
    %v391 = vmul.f32 %v302, %v383
    %393 = vrot.lane.b32.xlu0 %v391, 64
    %v394 = vpop.permute.xlu0 %393
    %v396 = vadd.f32 %v390, %v394
    %v397 = vstv %s373
    %v398 = vmul.f32 %v397, %v396
    %v399 = vadd.f32 %v371, %v398
    %v400 = vld [vmem:[#allocation3 + $0x3] sm:$0x1f]
    %s401 = sld [smem:[#allocation7 + $0x3]]
    %v402 = vadd.f32 %v315, %v400
    %v403 = vmax.f32 %v402, 0.0
    %v404 = vmul.f32 %v315, %v400
    %v405 = vmul.f32 %v326, %v400
    %v406 = vmul.f32 %v286, %v403
    %v407 = vmul.f32 %v289, %v404
    %409 = vrot.lane.b32.xlu0 %v407, 96
    %v410 = vpop.permute.xlu0 %409
    %v412 = vadd.f32 %v406, %v410
    %v413 = vmul.f32 %v302, %v405
    %415 = vrot.lane.b32.xlu0 %v413, 64
    %v416 = vpop.permute.xlu0 %415
    %v418 = vadd.f32 %v412, %v416
    %v419 = vstv %s401
    %v420 = vmul.f32 %v419, %v418
    %v421 = vadd.f32 %v399, %v420
    %s422 = sld [smem:[#allocation7 + $0x4]]
    %v423 = vadd.f32 %v344, %v400
    %v424 = vmax.f32 %v423, 0.0
    %v425 = vmul.f32 %v344, %v400
    %v426 = vmul.f32 %v354, %v400
    %v427 = vmul.f32 %v286, %v424
    %v428 = vmul.f32 %v289, %v425
    %430 = vrot.lane.b32.xlu0 %v428, 96
    %v431 = vpop.permute.xlu0 %430
    %v433 = vadd.f32 %v427, %v431
    %v434 = vmul.f32 %v302, %v426
    %436 = vrot.lane.b32.xlu0 %v434, 64
    %v437 = vpop.permute.xlu0 %436
    %v439 = vadd.f32 %v433, %v437
    %v440 = vstv %s422
    %v441 = vmul.f32 %v440, %v439
    %v442 = vadd.f32 %v421, %v441
    %s443 = sld [smem:[#allocation7 + $0x5]]
    %v444 = vadd.f32 %v372, %v400
    %v445 = vmax.f32 %v444, 0.0
    %v446 = vmul.f32 %v372, %v400
    %v447 = vmul.f32 %v382, %v400
    %v448 = vmul.f32 %v286, %v445
    %v449 = vmul.f32 %v289, %v446
    %451 = vrot.lane.b32.xlu0 %v449, 96
    %v452 = vpop.permute.xlu0 %451
    %v454 = vadd.f32 %v448, %v452
    %v455 = vmul.f32 %v302, %v447
    %457 = vrot.lane.b32.xlu0 %v455, 64
    %v458 = vpop.permute.xlu0 %457
    %v460 = vadd.f32 %v454, %v458
    %v461 = vstv %s443
    %v462 = vmul.f32 %v461, %v460
    %v463 = vadd.f32 %v442, %v462
    %v464 = vld [vmem:[#allocation3 + $0x5] sm:$0x1f]
    %s465 = sld [smem:[#allocation7 + $0x6]]
    %v466 = vadd.f32 %v315, %v464
    %v467 = vmax.f32 %v466, 0.0
    %v468 = vmul.f32 %v315, %v464
    %v469 = vmul.f32 %v326, %v464
    %v470 = vmul.f32 %v286, %v467
    %v471 = vmul.f32 %v289, %v468
    %473 = vrot.lane.b32.xlu0 %v471, 96
    %v474 = vpop.permute.xlu0 %473
    %v476 = vadd.f32 %v470, %v474
    %v477 = vmul.f32 %v302, %v469
    %479 = vrot.lane.b32.xlu0 %v477, 64
    %v480 = vpop.permute.xlu0 %479
    %v482 = vadd.f32 %v476, %v480
    %v483 = vstv %s465
    %v484 = vmul.f32 %v483, %v482
    %v485 = vadd.f32 %v463, %v484
    %s486 = sld [smem:[#allocation7 + $0x7]]
    %v487 = vadd.f32 %v344, %v464
    %v488 = vmax.f32 %v487, 0.0
    %v489 = vmul.f32 %v344, %v464
    %v490 = vmul.f32 %v354, %v464
    %v491 = vmul.f32 %v286, %v488
    %v492 = vmul.f32 %v289, %v489
    %494 = vrot.lane.b32.xlu0 %v492, 96
    %v495 = vpop.permute.xlu0 %494
    %v497 = vadd.f32 %v491, %v495
    %v498 = vmul.f32 %v302, %v490
    %500 = vrot.lane.b32.xlu0 %v498, 64
    %v501 = vpop.permute.xlu0 %500
    %v503 = vadd.f32 %v497, %v501
    %v504 = vstv %s486
    %v505 = vmul.f32 %v504, %v503
    %v506 = vadd.f32 %v485, %v505
    %s507 = sld [smem:[#allocation7 + $0x8]]
    %v508 = vadd.f32 %v372, %v464
    %v509 = vmax.f32 %v508, 0.0
    %v510 = vmul.f32 %v372, %v464
    %v511 = vmul.f32 %v382, %v464
    %v512 = vmul.f32 %v286, %v509
    %v513 = vmul.f32 %v289, %v510
    %515 = vrot.lane.b32.xlu0 %v513, 96
    %v516 = vpop.permute.xlu0 %515
    %v518 = vadd.f32 %v512, %v516
    %v519 = vmul.f32 %v302, %v511
    %521 = vrot.lane.b32.xlu0 %v519, 64
    %v522 = vpop.permute.xlu0 %521
    %v524 = vadd.f32 %v518, %v522
    %v525 = vstv %s507
    %v526 = vmul.f32 %v525, %v524
    %v527 = vadd.f32 %v506, %v526
    %v528 = vstv %s259
    %v529 = vmul.f32 %v528, %v313
    %v530 = vmul.f32 %v528, %v314
    %vm531 = vcmask 39936
    %v533 = vsel %vm531, %v260, 0
    %v536 = vsel %vm531, %v261, 0
    %vm538 = vcmask 1044480
    %v540 = vsel %vm538, %v527, 0
    %542 = vmatprep.subr.mxu0 0.0
    %543 = vmatpush1.msra.mxu0 %v540
    %544 = vmatprep.subr.mxu0 0.0
    %545 = vmatpush1.msra.mxu0 0.0
    %546 = vmatprep.subr.mxu0 0.0
    %547 = vmatpush1.msra.mxu0 0.0
    %548 = vmatprep.subr.mxu0 0.0
    %549 = vmatpush1.msra.mxu0 0.0
    %550 = vmatprep.subr.mxu0 0.0
    %551 = vmatpush1.msra.mxu0 0.0
    %552 = vmatprep.subr.mxu0 0.0
    %553 = vmatpush1.msra.mxu0 0.0
    %554 = vmatprep.subr.mxu0 0.0
    %555 = vmatpush1.msra.mxu0 0.0
    %556 = vmatprep.subr.mxu0 0.0
    %557 = vmatpush1.msra.mxu0 0.0
    %558 = vmatprep.subr.mxu0 0.0
    %559 = vmatpush1.msra.mxu0 0.0
    %560 = vmatprep.subr.mxu0 0.0
    %561 = vmatpush1.msra.mxu0 0.0
    %562 = vmatprep.subr.mxu0 0.0
    %563 = vmatpush1.msra.mxu0 0.0
    %564 = vmatprep.subr.mxu0 0.0
    %565 = vmatpush1.msra.mxu0 0.0
    %566 = vmatprep.subr.mxu0 0.0
    %567 = vmatpush1.msra.mxu0 0.0
    %568 = vmatprep.subr.mxu0 0.0
    %569 = vmatpush1.msra.mxu0 0.0
    %570 = vmatprep.subr.mxu0 0.0
    %571 = vmatpush1.msra.mxu0 0.0
    %572 = vmatprep.subr.mxu0 0.0
    %573 = vmatpush1.msra.mxu0 0.0
    %574 = vmatprep.subr.mxu0 0.0
    %575 = vmatpush1.msra.mxu0 0.0
    %576 = vmatprep.subr.mxu0 0.0
    %577 = vmatpush1.msra.mxu0 0.0
    %578 = vmatprep.subr.mxu0 0.0
    %579 = vmatpush1.msra.mxu0 0.0
    %580 = vmatprep.subr.mxu0 0.0
    %581 = vmatpush1.msra.mxu0 0.0
    %582 = vmatprep.subr.mxu0 0.0
    %583 = vmatpush1.msra.mxu0 0.0
    %584 = vmatprep.subr.mxu0 0.0
    %585 = vmatpush1.msra.mxu0 0.0
    %586 = vmatprep.subr.mxu0 0.0
    %587 = vmatpush1.msra.mxu0 0.0
    %588 = vmatprep.subr.mxu0 0.0
    %589 = vmatpush1.msra.mxu0 0.0
    %590 = vmatprep.subr.mxu0 0.0
    %591 = vmatpush1.msra.mxu0 0.0
    %592 = vmatprep.subr.mxu0 0.0
    %593 = vmatpush1.msra.mxu0 0.0
    %594 = vmatprep.subr.mxu0 0.0
    %595 = vmatpush1.msra.mxu0 0.0
    %596 = vmatprep.subr.mxu0 0.0
    %597 = vmatpush1.msra.mxu0 0.0
    %598 = vmatprep.subr.mxu0 0.0
    %599 = vmatpush1.msra.mxu0 0.0
    %600 = vmatprep.subr.mxu0 0.0
    %601 = vmatpush1.msra.mxu0 0.0
    %602 = vmatprep.subr.mxu0 0.0
    %603 = vmatpush1.msra.mxu0 0.0
    %604 = vmatprep.subr.mxu0 0.0
    %605 = vmatpush1.msra.mxu0 0.0
    %606 = vmatprep.mubr.f32.mxu0 0.0
    %607 = vmatmul.mubr.f32.gmra.mrb[0].mxu0 %v533
    %v608 = vpop.f32.mrb[0].mxu0
    %v609 = vadd.f32 0.0, %v608
    %v610 = vpop.f32.mrb[0].mxu0
    %611 = vmatprep.mubr.f32.mxu0 0.0
    %612 = vmatmul.mubr.f32.gmra.mrb[0].mxu0 %v536
    %v613 = vpop.f32.mrb[0].mxu0
    %v614 = vadd.f32 0.0, %v613
    %v615 = vpop.f32.mrb[0].mxu0
    %616 = vdwg.mxu0
    %v617 = vadd.f32 %v529, %v609
    %v618 = vadd.f32 %v530, %v614
    %619 = vst.msk [vmem:[%s8] sm:$0xff] %vm62, %v617
    %vm620 = vcmask 254976
    %621 = vst.msk [vmem:[%s8 + $0x8] sm:$0x3] %vm620, %v618
    %v622 = vld [vmem:[#allocation2 + $0xa] sm:$0xff]
    %v623 = vld [vmem:[#allocation2 + $0x12] sm:$0x3]
    %v624 = vld [vmem:[#allocation3 + $0xa] sm:$0xff]
    %v625 = vld [vmem:[#allocation3 + $0x12] sm:$0x3]
    %v626 = vadd.f32 %v622, %v624
    %v627 = vadd.f32 %v623, %v625
    %v628 = vmax.f32 %v626, 0.0
    %v629 = vmax.f32 %v627, 0.0
    %v630 = vmul.f32 %v622, %v624
    %v631 = vmul.f32 %v623, %v625
    %v632 = vxor.u32 %v622, 2147483648
    %v633 = vxor.u32 %v623, 2147483648
    %v634 = vmul.f32 %v632, 1.442695
    %v635 = vpow.pop %v634
    %v636 = vmul.f32 %v633, 1.442695
    %v637 = vpow.pop %v636
    %v638 = vadd.f32 %v635, 1.0
    %v639 = vadd.f32 %v637, 1.0
    %v640 = vrcp.pop %v638
    %v641 = vmul.f32 1.0, %v640
    %v642 = vrcp.pop %v639
    %v643 = vmul.f32 1.0, %v642
    %v644 = vmul.f32 %v641, %v624
    %v645 = vmul.f32 %v643, %v625
    %v646 = vmul.f32 %v286, %v628
    %v647 = vmul.f32 %v286, %v629
    %v648 = vmul.f32 %v289, %v630
    %v649 = vmul.f32 %v289, %v631
    %652 = vrot.lane.b32.xlu0 %v648, 96
    %v653 = vpop.permute.xlu0 %652
    %654 = vrot.lane.b32.xlu0 %v649, 96
    %v655 = vpop.permute.xlu0 %654
    %v658 = vadd.f32 %v646, %v653
    %v659 = vadd.f32 %v647, %v655
    %v660 = vmul.f32 %v302, %v644
    %v661 = vmul.f32 %v302, %v645
    %664 = vrot.lane.b32.xlu0 %v660, 64
    %v665 = vpop.permute.xlu0 %664
    %666 = vrot.lane.b32.xlu0 %v661, 64
    %v667 = vpop.permute.xlu0 %666
    %v670 = vadd.f32 %v658, %v665
    %v671 = vadd.f32 %v659, %v667
    %v672 = vld [vmem:[#allocation2 + $0xb] sm:$0x1f]
    %v673 = vld [vmem:[#allocation3 + $0xb] sm:$0x1f]
    %s674 = sld [smem:[#allocation7]]
    %v675 = vadd.f32 %v672, %v673
    %v676 = vmax.f32 %v675, 0.0
    %v677 = vmul.f32 %v672, %v673
    %v678 = vxor.u32 %v672, 2147483648
    %v679 = vmul.f32 %v678, 1.442695
    %v680 = vpow.pop %v679
    %v681 = vadd.f32 %v680, 1.0
    %v682 = vrcp.pop %v681
    %v683 = vmul.f32 1.0, %v682
    %v684 = vmul.f32 %v683, %v673
    %v685 = vmul.f32 %v286, %v676
    %v686 = vmul.f32 %v289, %v677
    %688 = vrot.lane.b32.xlu0 %v686, 96
    %v689 = vpop.permute.xlu0 %688
    %v691 = vadd.f32 %v685, %v689
    %v692 = vmul.f32 %v302, %v684
    %694 = vrot.lane.b32.xlu0 %v692, 64
    %v695 = vpop.permute.xlu0 %694
    %v697 = vadd.f32 %v691, %v695
    %v698 = vstv %s674
    %v699 = vmul.f32 %v698, %v697
    %v700 = vadd.f32 %v699, 0.0
    %v701 = vld [vmem:[#allocation2 + $0xd] sm:$0x1f]
    %s702 = sld [smem:[#allocation7 + $0x1]]
    %v703 = vadd.f32 %v701, %v673
    %v704 = vmax.f32 %v703, 0.0
    %v705 = vmul.f32 %v701, %v673
    %v706 = vxor.u32 %v701, 2147483648
    %v707 = vmul.f32 %v706, 1.442695
    %v708 = vpow.pop %v707
    %v709 = vadd.f32 %v708, 1.0
    %v710 = vrcp.pop %v709
    %v711 = vmul.f32 1.0, %v710
    %v712 = vmul.f32 %v711, %v673
    %v713 = vmul.f32 %v286, %v704
    %v714 = vmul.f32 %v289, %v705
    %716 = vrot.lane.b32.xlu0 %v714, 96
    %v717 = vpop.permute.xlu0 %716
    %v719 = vadd.f32 %v713, %v717
    %v720 = vmul.f32 %v302, %v712
    %722 = vrot.lane.b32.xlu0 %v720, 64
    %v723 = vpop.permute.xlu0 %722
    %v725 = vadd.f32 %v719, %v723
    %v726 = vstv %s702
    %v727 = vmul.f32 %v726, %v725
    %v728 = vadd.f32 %v700, %v727
    %v729 = vld [vmem:[#allocation2 + $0xf] sm:$0x1f]
    %s730 = sld [smem:[#allocation7 + $0x2]]
    %v731 = vadd.f32 %v729, %v673
    %v732 = vmax.f32 %v731, 0.0
    %v733 = vmul.f32 %v729, %v673
    %v734 = vxor.u32 %v729, 2147483648
    %v735 = vmul.f32 %v734, 1.442695
    %v736 = vpow.pop %v735
    %v737 = vadd.f32 %v736, 1.0
    %v738 = vrcp.pop %v737
    %v739 = vmul.f32 1.0, %v738
    %v740 = vmul.f32 %v739, %v673
    %v741 = vmul.f32 %v286, %v732
    %v742 = vmul.f32 %v289, %v733
    %744 = vrot.lane.b32.xlu0 %v742, 96
    %v745 = vpop.permute.xlu0 %744
    %v747 = vadd.f32 %v741, %v745
    %v748 = vmul.f32 %v302, %v740
    %750 = vrot.lane.b32.xlu0 %v748, 64
    %v751 = vpop.permute.xlu0 %750
    %v753 = vadd.f32 %v747, %v751
    %v754 = vstv %s730
    %v755 = vmul.f32 %v754, %v753
    %v756 = vadd.f32 %v728, %v755
    %v757 = vld [vmem:[#allocation3 + $0xd] sm:$0x1f]
    %s758 = sld [smem:[#allocation7 + $0x3]]
    %v759 = vadd.f32 %v672, %v757
    %v760 = vmax.f32 %v759, 0.0
    %v761 = vmul.f32 %v672, %v757
    %v762 = vmul.f32 %v683, %v757
    %v763 = vmul.f32 %v286, %v760
    %v764 = vmul.f32 %v289, %v761
    %766 = vrot.lane.b32.xlu0 %v764, 96
    %v767 = vpop.permute.xlu0 %766
    %v769 = vadd.f32 %v763, %v767
    %v770 = vmul.f32 %v302, %v762
    %772 = vrot.lane.b32.xlu0 %v770, 64
    %v773 = vpop.permute.xlu0 %772
    %v775 = vadd.f32 %v769, %v773
    %v776 = vstv %s758
    %v777 = vmul.f32 %v776, %v775
    %v778 = vadd.f32 %v756, %v777
    %s779 = sld [smem:[#allocation7 + $0x4]]
    %v780 = vadd.f32 %v701, %v757
    %v781 = vmax.f32 %v780, 0.0
    %v782 = vmul.f32 %v701, %v757
    %v783 = vmul.f32 %v711, %v757
    %v784 = vmul.f32 %v286, %v781
    %v785 = vmul.f32 %v289, %v782
    %787 = vrot.lane.b32.xlu0 %v785, 96
    %v788 = vpop.permute.xlu0 %787
    %v790 = vadd.f32 %v784, %v788
    %v791 = vmul.f32 %v302, %v783
    %793 = vrot.lane.b32.xlu0 %v791, 64
    %v794 = vpop.permute.xlu0 %793
    %v796 = vadd.f32 %v790, %v794
    %v797 = vstv %s779
    %v798 = vmul.f32 %v797, %v796
    %v799 = vadd.f32 %v778, %v798
    %s800 = sld [smem:[#allocation7 + $0x5]]
    %v801 = vadd.f32 %v729, %v757
    %v802 = vmax.f32 %v801, 0.0
    %v803 = vmul.f32 %v729, %v757
    %v804 = vmul.f32 %v739, %v757
    %v805 = vmul.f32 %v286, %v802
    %v806 = vmul.f32 %v289, %v803
    %808 = vrot.lane.b32.xlu0 %v806, 96
    %v809 = vpop.permute.xlu0 %808
    %v811 = vadd.f32 %v805, %v809
    %v812 = vmul.f32 %v302, %v804
    %814 = vrot.lane.b32.xlu0 %v812, 64
    %v815 = vpop.permute.xlu0 %814
    %v817 = vadd.f32 %v811, %v815
    %v818 = vstv %s800
    %v819 = vmul.f32 %v818, %v817
    %v820 = vadd.f32 %v799, %v819
    %v821 = vld [vmem:[#allocation3 + $0xf] sm:$0x1f]
    %s822 = sld [smem:[#allocation7 + $0x6]]
    %v823 = vadd.f32 %v672, %v821
    %v824 = vmax.f32 %v823, 0.0
    %v825 = vmul.f32 %v672, %v821
    %v826 = vmul.f32 %v683, %v821
    %v827 = vmul.f32 %v286, %v824
    %v828 = vmul.f32 %v289, %v825
    %830 = vrot.lane.b32.xlu0 %v828, 96
    %v831 = vpop.permute.xlu0 %830
    %v833 = vadd.f32 %v827, %v831
    %v834 = vmul.f32 %v302, %v826
    %836 = vrot.lane.b32.xlu0 %v834, 64
    %v837 = vpop.permute.xlu0 %836
    %v839 = vadd.f32 %v833, %v837
    %v840 = vstv %s822
    %v841 = vmul.f32 %v840, %v839
    %v842 = vadd.f32 %v820, %v841
    %s843 = sld [smem:[#allocation7 + $0x7]]
    %v844 = vadd.f32 %v701, %v821
    %v845 = vmax.f32 %v844, 0.0
    %v846 = vmul.f32 %v701, %v821
    %v847 = vmul.f32 %v711, %v821
    %v848 = vmul.f32 %v286, %v845
    %v849 = vmul.f32 %v289, %v846
    %851 = vrot.lane.b32.xlu0 %v849, 96
    %v852 = vpop.permute.xlu0 %851
    %v854 = vadd.f32 %v848, %v852
    %v855 = vmul.f32 %v302, %v847
    %857 = vrot.lane.b32.xlu0 %v855, 64
    %v858 = vpop.permute.xlu0 %857
    %v860 = vadd.f32 %v854, %v858
    %v861 = vstv %s843
    %v862 = vmul.f32 %v861, %v860
    %v863 = vadd.f32 %v842, %v862
    %s864 = sld [smem:[#allocation7 + $0x8]]
    %v865 = vadd.f32 %v729, %v821
    %v866 = vmax.f32 %v865, 0.0
    %v867 = vmul.f32 %v729, %v821
    %v868 = vmul.f32 %v739, %v821
    %v869 = vmul.f32 %v286, %v866
    %v870 = vmul.f32 %v289, %v867
    %872 = vrot.lane.b32.xlu0 %v870, 96
    %v873 = vpop.permute.xlu0 %872
    %v875 = vadd.f32 %v869, %v873
    %v876 = vmul.f32 %v302, %v868
    %878 = vrot.lane.b32.xlu0 %v876, 64
    %v879 = vpop.permute.xlu0 %878
    %v881 = vadd.f32 %v875, %v879
    %v882 = vstv %s864
    %v883 = vmul.f32 %v882, %v881
    %v884 = vadd.f32 %v863, %v883
    %v885 = vmul.f32 %v528, %v670
    %v886 = vmul.f32 %v528, %v671
    %v888 = vsel %vm538, %v884, 0
    %890 = vmatprep.subr.mxu0 0.0
    %891 = vmatpush1.msra.mxu0 %v888
    %892 = vmatprep.subr.mxu0 0.0
    %893 = vmatpush1.msra.mxu0 0.0
    %894 = vmatprep.subr.mxu0 0.0
    %895 = vmatpush1.msra.mxu0 0.0
    %896 = vmatprep.subr.mxu0 0.0
    %897 = vmatpush1.msra.mxu0 0.0
    %898 = vmatprep.subr.mxu0 0.0
    %899 = vmatpush1.msra.mxu0 0.0
    %900 = vmatprep.subr.mxu0 0.0
    %901 = vmatpush1.msra.mxu0 0.0
    %902 = vmatprep.subr.mxu0 0.0
    %903 = vmatpush1.msra.mxu0 0.0
    %904 = vmatprep.subr.mxu0 0.0
    %905 = vmatpush1.msra.mxu0 0.0
    %906 = vmatprep.subr.mxu0 0.0
    %907 = vmatpush1.msra.mxu0 0.0
    %908 = vmatprep.subr.mxu0 0.0
    %909 = vmatpush1.msra.mxu0 0.0
    %910 = vmatprep.subr.mxu0 0.0
    %911 = vmatpush1.msra.mxu0 0.0
    %912 = vmatprep.subr.mxu0 0.0
    %913 = vmatpush1.msra.mxu0 0.0
    %914 = vmatprep.subr.mxu0 0.0
    %915 = vmatpush1.msra.mxu0 0.0
    %916 = vmatprep.subr.mxu0 0.0
    %917 = vmatpush1.msra.mxu0 0.0
    %918 = vmatprep.subr.mxu0 0.0
    %919 = vmatpush1.msra.mxu0 0.0
    %920 = vmatprep.subr.mxu0 0.0
    %921 = vmatpush1.msra.mxu0 0.0
    %922 = vmatprep.subr.mxu0 0.0
    %923 = vmatpush1.msra.mxu0 0.0
    %924 = vmatprep.subr.mxu0 0.0
    %925 = vmatpush1.msra.mxu0 0.0
    %926 = vmatprep.subr.mxu0 0.0
    %927 = vmatpush1.msra.mxu0 0.0
    %928 = vmatprep.subr.mxu0 0.0
    %929 = vmatpush1.msra.mxu0 0.0
    %930 = vmatprep.subr.mxu0 0.0
    %931 = vmatpush1.msra.mxu0 0.0
    %932 = vmatprep.subr.mxu0 0.0
    %933 = vmatpush1.msra.mxu0 0.0
    %934 = vmatprep.subr.mxu0 0.0
    %935 = vmatpush1.msra.mxu0 0.0
    %936 = vmatprep.subr.mxu0 0.0
    %937 = vmatpush1.msra.mxu0 0.0
    %938 = vmatprep.subr.mxu0 0.0
    %939 = vmatpush1.msra.mxu0 0.0
    %940 = vmatprep.subr.mxu0 0.0
    %941 = vmatpush1.msra.mxu0 0.0
    %942 = vmatprep.subr.mxu0 0.0
    %943 = vmatpush1.msra.mxu0 0.0
    %944 = vmatprep.subr.mxu0 0.0
    %945 = vmatpush1.msra.mxu0 0.0
    %946 = vmatprep.subr.mxu0 0.0
    %947 = vmatpush1.msra.mxu0 0.0
    %948 = vmatprep.subr.mxu0 0.0
    %949 = vmatpush1.msra.mxu0 0.0
    %950 = vmatprep.subr.mxu0 0.0
    %951 = vmatpush1.msra.mxu0 0.0
    %952 = vmatprep.subr.mxu0 0.0
    %953 = vmatpush1.msra.mxu0 0.0
    %954 = vmatprep.mubr.f32.mxu0 0.0
    %955 = vmatmul.mubr.f32.gmra.mrb[0].mxu0 %v533
    %v956 = vpop.f32.mrb[0].mxu0
    %v957 = vadd.f32 0.0, %v956
    %v958 = vpop.f32.mrb[0].mxu0
    %959 = vmatprep.mubr.f32.mxu0 0.0
    %960 = vmatmul.mubr.f32.gmra.mrb[0].mxu0 %v536
    %v961 = vpop.f32.mrb[0].mxu0
    %v962 = vadd.f32 0.0, %v961
    %v963 = vpop.f32.mrb[0].mxu0
    %964 = vdwg.mxu0
    %v965 = vadd.f32 %v885, %v957
    %v966 = vadd.f32 %v886, %v962
    %s967 = scalar_lea.vmem %s8, 16
    %968 = vst.msk [vmem:[%s967] sm:$0xff] %vm62, %v965
    %969 = vst.msk [vmem:[%s967 + $0x8] sm:$0x3] %vm620, %v966
    // Predicated region
    $region42: #{forward.1} parent=1 // pred_check
      _
    $region43: #{forward.1} parent=1 // pred_check_branch
      %971 = sbr.rel (0) target = $region45
    $region44: #{forward.1} parent=1 // pred_region
      _
    $region45: #{forward.1} parent=1 // pred_fallthru
      _
    // Predicated region
    $region46: #{forward.1} parent=1 // pred_check
      _
    $region47: #{forward.1} parent=1 // pred_check_branch
      %973 = sbr.rel (0) target = $region49
    $region48: #{forward.1} parent=1 // pred_region
      _
    $region49: #{forward.1} parent=1 // pred_fallthru
      _
    %974 = vsyncpa [#allocation6], 1
    %975 = vsyncpa [#allocation8], 1

</llo_original>
